<compile_context>
chip_gen: v7x
topology: tpu7x:2x2x1
jax: 0.10.0
libtpu: 0.0.40
codegen_flags: <defaults>
</compile_context>

<pallas_src>
import numpy as np
import jax
import jax.numpy as jnp
from jax import lax
from jax.experimental import pallas as pl
from jax.experimental.pallas import tpu as pltpu

_LOG_EPS = float(np.log(1e-6))


def _round_up(x, m):
    return ((x + m - 1) // m) * m


# ----------------------------------------------------------------------------
# Pallas kernel: one teacher-forced decode step per grid point (b_block, t).
# Hidden state is carried across t in a VMEM scratch.
# ----------------------------------------------------------------------------
def decoder_step_kernel(
    # per-batch-block, loop-invariant inputs
    hidden0_ref,      # [BB, H]
    enc_ref,          # [BB, S, H]
    ee_ref,           # [BB, S, H]   precomputed enc @ W_e + attn_b
    mask_ref,         # [BB, S]
    # per-step inputs
    slab_ref,         # [BB, SLAB]   lanes: [0:H]=embedded, [H]=rate, [H+1:H+1+R]=rid, [H+1+R]=1.0
    constraint_ref,   # [BB, ID]
    # parameters (resident)
    emb_ref,          # [ID, H]
    attn_wh_ref,      # [H, H]
    v_w_ref,          # [1, H]
    w_w_gru_ref,      # [H, 4H]      columns: r | z | n_ih | n_hh
    w_h_gru_ref,      # [H, 4H]
    w_slab_gru_ref,   # [SLAB, 4H]
    b_gru_ref,        # [1, 4H]
    fc_id_w_ref,      # [H, ID]
    fc_id_b_ref,      # [1, ID]
    tandem_w_id_ref,  # [H, H]
    tandem_w_h_ref,   # [H, H]
    tandem_b_ref,     # [1, H]
    w_rate_h_ref,     # [1, H]
    w_rate_slab_ref,  # [1, SLAB]    rid weights at rid lanes, fc_rate bias at the 1.0 lane
    # outputs (lane-dense)
    pred_id_ref,      # [BB, ID]
    aux_ref,          # [BB, AUXW]   cols [0:H]=hidden_t, col [H]=pred_rate_t
    # scratch
    h_scratch,        # VMEM [BB, H]
):
    f32 = jnp.float32
    BB, H = h_scratch.shape
    ID = fc_id_w_ref.shape[1]
    AUXW = aux_ref.shape[1]
    t = pl.program_id(1)

    @pl.when(t == 0)
    def _init():
        h_scratch[...] = hidden0_ref[...]

    h = h_scratch[...]                                                   # [BB, H]
    slab = slab_ref[...]                                                 # [BB, SLAB]
    cmask = constraint_ref[...]                                          # [BB, ID]
    iota_id = lax.broadcasted_iota(jnp.int32, (BB, ID), 1)

    # ---- attention: softmax(v . tanh(W_h h + (W_e enc + b))) with mask ----
    e_h = jnp.dot(h, attn_wh_ref[...], preferred_element_type=f32)       # [BB, H]
    energy = jnp.tanh(ee_ref[...] + e_h[:, None, :])                     # [BB, S, H]
    att = jnp.sum(energy * v_w_ref[...].reshape(1, 1, H), axis=2)        # [BB, S]
    att = jnp.where(mask_ref[...] == 0.0, -1000000.0, att)
    amax = jnp.max(att, axis=1, keepdims=True)
    aexp = jnp.exp(att - amax)
    a = aexp * pl.reciprocal(jnp.sum(aexp, axis=1, keepdims=True), approx=True)
    weighted = jnp.sum(a[:, :, None] * enc_ref[...], axis=1)             # [BB, H]

    # ---- GRU cell: three lane-aligned matmuls (no concat), columns r | z | n_ih | n_hh ----
    g = (jnp.dot(weighted, w_w_gru_ref[...], preferred_element_type=f32)
         + jnp.dot(h, w_h_gru_ref[...], preferred_element_type=f32)
         + jnp.dot(slab, w_slab_gru_ref[...], preferred_element_type=f32)
         + b_gru_ref[...])                                               # [BB, 4H]
    r = jax.nn.sigmoid(g[:, :H])
    z = jax.nn.sigmoid(g[:, H:2 * H])
    n = jnp.tanh(g[:, 2 * H:3 * H] + r * g[:, 3 * H:])
    h_new = (1.0 - z) * n + z * h                                        # [BB, H]

    # ---- id head: mask_log_softmax computed directly in log space (no B*ID log) ----
    logits = jnp.dot(h_new, fc_id_w_ref[...], preferred_element_type=f32) + fc_id_b_ref[...]
    maxes = jnp.max(logits, axis=1, keepdims=True)
    x_sum = jnp.sum(jnp.exp(logits - maxes) * cmask, axis=1, keepdims=True)
    log_norm = jnp.log(x_sum + 1e-6)                                     # [BB, 1]
    pred_id = jnp.where(cmask != 0.0,
                        jnp.clip(logits - maxes - log_norm, _LOG_EPS, 0.0),
                        _LOG_EPS)                                        # [BB, ID]

    # ---- argmax (first max index, on the same pred_id tensor) + embedding lookup ----
    pmax = jnp.max(pred_id, axis=1, keepdims=True)
    idx = jnp.min(jnp.where(pred_id == pmax, iota_id, ID), axis=1, keepdims=True)
    onehot_max = (iota_id == idx).astype(f32)
    id_emb = jnp.dot(onehot_max, emb_ref[...], preferred_element_type=f32)   # [BB, H]

    # ---- rate head: tandem_fc (Linear+ReLU, split weights -> no concat) -> Linear -> sigmoid ----
    rate_h = jnp.maximum(
        jnp.dot(id_emb, tandem_w_id_ref[...], preferred_element_type=f32)
        + jnp.dot(h_new, tandem_w_h_ref[...], preferred_element_type=f32)
        + tandem_b_ref[...], 0.0)                                        # [BB, H]
    rate_lin = (jnp.sum(rate_h * w_rate_h_ref[...], axis=1, keepdims=True)
                + jnp.sum(slab * w_rate_slab_ref[...], axis=1, keepdims=True))  # rid + bias lane
    pred_rate = jax.nn.sigmoid(rate_lin)                                 # [BB, 1]

    # ---- lane-dense stores ----
    pred_id_ref[...] = pred_id
    pad_w = AUXW - H - 1
    parts = [h_new, pred_rate] + ([jnp.zeros((BB, pad_w), f32)] if pad_w > 0 else [])
    aux_ref[...] = jnp.concatenate(parts, axis=1)
    h_scratch[...] = h_new


# ----------------------------------------------------------------------------
# Wrapper: parameter re-layout (lane-aligned with the input slab) + pallas_call
# ----------------------------------------------------------------------------
def _pack_params(params, H, R, SLAB):
    f32 = jnp.float32
    w_ih = params["w_ih"].astype(f32)     # [2H+1, 3H]   rows: weighted | embedded | rate
    w_hh = params["w_hh"].astype(f32)     # [H, 3H]
    b_ih = params["b_ih"].astype(f32)
    b_hh = params["b_hh"].astype(f32)

    def pack_x(rows):                     # [k, 3H] -> [k, 4H]  (r|z|n_ih|0)
        k = rows.shape[0]
        return jnp.concatenate([rows[:, :2 * H], rows[:, 2 * H:], jnp.zeros((k, H), f32)], axis=1)

    w_w_gru = pack_x(w_ih[:H])                                           # [H, 4H]
    w_slab_gru = (jnp.zeros((SLAB, 4 * H), f32)
                  .at[:H].set(pack_x(w_ih[H:2 * H]))                     # embedded lanes
                  .at[H:H + 1].set(pack_x(w_ih[2 * H:2 * H + 1])))       # rate lane
    w_h_gru = jnp.concatenate([w_hh[:, :2 * H], jnp.zeros((H, H), f32), w_hh[:, 2 * H:]],
                              axis=1)                                    # [H, 4H]  (r|z|0|n_hh)
    b_gru = jnp.concatenate(
        [b_ih[:, :2 * H] + b_hh[:, :2 * H], b_ih[:, 2 * H:], b_hh[:, 2 * H:]], axis=1)

    attn_wh = params["attn_w"][:H].astype(f32)
    attn_we = params["attn_w"][H:].astype(f32)
    tandem_w_id = params["tandem_w"][:H].astype(f32)
    tandem_w_h = params["tandem_w"][H:].astype(f32)
    w_rate_h = params["fc_rate_w"][:, :H].astype(f32)
    w_rate_slab = (jnp.zeros((1, SLAB), f32)
                   .at[:, H + 1:H + 1 + R].set(params["fc_rate_w"][:, H:].astype(f32))
                   .at[:, H + 1 + R].set(params["fc_rate_b"].astype(f32)[0, 0]))
    return (attn_wh, attn_we, w_w_gru, w_h_gru, w_slab_gru, b_gru,
            tandem_w_id, tandem_w_h, w_rate_h, w_rate_slab)


@jax.jit
def decoder_multi_forward_fused(params, input_ids, input_rates, hidden, encoder_outputs,
                                attn_mask, constraint_vecs, pro_features, online_features,
                                rid_features):
    """Run T teacher-forced decode steps in one pallas_call.
    Shapes: input_ids [T,B,1] int, input_rates [T,B,1], hidden [1,B,H],
    encoder_outputs [S,B,H], attn_mask [B,S], constraint_vecs [T,B,ID], rid_features [T,B,R]."""
    del pro_features, online_features      # online_features_flag=False; pro_features unused
    f32 = jnp.float32
    T, B = input_ids.shape[0], input_ids.shape[1]
    H = hidden.shape[2]
    S = encoder_outputs.shape[0]
    ID = params["emb_id"].shape[0]
    R = rid_features.shape[2]
    SLAB = _round_up(H + 1 + R + 1, 128)   # embedded | rate | rid | bias-lane | zero pad
    AUXW = _round_up(H + 1, 128)           # hidden | rate | zero pad
    BB = B if B <= 8 else 8                # batch block (parallel grid axis for v7x megacore)
    assert B % BB == 0
    nb = B // BB

    emb_tbl = params["emb_id"].astype(f32)                               # [ID, H]
    enc_bm = jnp.transpose(encoder_outputs, (1, 0, 2)).astype(f32)       # [B, S, H]

    (attn_wh, attn_we, w_w_gru, w_h_gru, w_slab_gru, b_gru,
     tandem_w_id, tandem_w_h, w_rate_h, w_rate_slab) = _pack_params(params, H, R, SLAB)

    # Loop-invariant encoder-side attention projection (computed once, not per step).
    e_e = jnp.einsum("bsh,hk->bsk", enc_bm, attn_we) + params["attn_b"].astype(f32).reshape(1, 1, H)

    # Hoisted teacher-forced embedding lookup + lane-dense per-step input slab.
    # TODO(synk): nn.Dropout on embeddings is identity in eval mode; not modeled.
    embedded_all = emb_tbl[input_ids[:, :, 0].astype(jnp.int32)]         # [T, B, H]
    slab = (jnp.zeros((T, B, SLAB), f32)
            .at[:, :, :H].set(embedded_all)
            .at[:, :, H:H + 1].set(input_rates.astype(f32))
            .at[:, :, H + 1:H + 1 + R].set(rid_features.astype(f32))
            .at[:, :, H + 1 + R].set(1.0))                               # bias lane for fc_rate_out

    def bmap2(b, t): return (b, 0)
    def bmap3(b, t): return (b, 0, 0)
    def tmap(b, t): return (t, b, 0)
    def wmap(b, t): return (0, 0)

    in_specs = [
        pl.BlockSpec((BB, H), bmap2),                 # hidden0
        pl.BlockSpec((BB, S, H), bmap3),              # enc
        pl.BlockSpec((BB, S, H), bmap3),              # e_e
        pl.BlockSpec((BB, S), bmap2),                 # attn_mask
        pl.BlockSpec((None, BB, SLAB), tmap),         # per-step input slab
        pl.BlockSpec((None, BB, ID), tmap),           # per-step constraint
        pl.BlockSpec((ID, H), wmap),                  # emb table
        pl.BlockSpec((H, H), wmap),                   # attn_wh
        pl.BlockSpec((1, H), wmap),                   # v_w
        pl.BlockSpec((H, 4 * H), wmap),               # w_w_gru
        pl.BlockSpec((H, 4 * H), wmap),               # w_h_gru
        pl.BlockSpec((SLAB, 4 * H), wmap),            # w_slab_gru
        pl.BlockSpec((1, 4 * H), wmap),               # b_gru
        pl.BlockSpec((H, ID), wmap),                  # fc_id_w
        pl.BlockSpec((1, ID), wmap),                  # fc_id_b
        pl.BlockSpec((H, H), wmap),                   # tandem_w_id
        pl.BlockSpec((H, H), wmap),                   # tandem_w_h
        pl.BlockSpec((1, H), wmap),                   # tandem_b
        pl.BlockSpec((1, H), wmap),                   # w_rate_h
        pl.BlockSpec((1, SLAB), wmap),                # w_rate_slab (rid weights + bias lane)
    ]
    out_specs = [
        pl.BlockSpec((None, BB, ID), tmap),           # pred_id
        pl.BlockSpec((None, BB, AUXW), tmap),         # aux: hidden | rate
    ]

    # Explicit VMEM budget (double-buffered per-step blocks + resident weights/blocks + scratch).
    blk_in = 2 * (BB * H + 2 * BB * S * H + BB * S + BB * SLAB + BB * ID)
    blk_out = 2 * (BB * ID + BB * AUXW)
    weights = (ID * H + H * H + H + 3 * H * 4 * H + SLAB * 4 * H + 4 * H + H * ID + ID
               + 2 * H * H + 2 * H + SLAB)
    vmem_limit = int(min(64 * 1024 * 1024,
                         max(8 * 1024 * 1024, 8 * (blk_in + blk_out + 2 * weights + BB * H))))

    pred_id, aux = pl.pallas_call(
        decoder_step_kernel,
        out_shape=(jax.ShapeDtypeStruct((T, B, ID), f32),
                   jax.ShapeDtypeStruct((T, B, AUXW), f32)),
        grid_spec=pltpu.PrefetchScalarGridSpec(
            num_scalar_prefetch=0,
            grid=(nb, T),
            in_specs=in_specs,
            out_specs=out_specs,
            scratch_shapes=[pltpu.VMEM((BB, H), f32)]),
        compiler_params=pltpu.CompilerParams(
            dimension_semantics=("parallel", "arbitrary"),
            vmem_limit_bytes=vmem_limit),
    )(hidden[0].astype(f32), enc_bm, e_e, attn_mask.astype(f32), slab,
      constraint_vecs.astype(f32), emb_tbl, attn_wh, params["v_w"].astype(f32),
      w_w_gru, w_h_gru, w_slab_gru, b_gru,
      params["fc_id_w"].astype(f32), params["fc_id_b"].astype(f32),
      tandem_w_id, tandem_w_h, params["tandem_b"].astype(f32),
      w_rate_h, w_rate_slab)

    pred_rates = aux[:, :, H:H + 1]          # [T, B, 1]
    hidden_out = aux[T - 1, :, :H][None]     # [1, B, H] (final hidden)
    return pred_id, pred_rates, hidden_out


def decoder_multi_forward(params, input_id, input_rate, hidden, encoder_outputs,
                          attn_mask, constraint_vec, pro_features, online_features,
                          rid_features):
    """Single-step API matching the PyTorch module forward exactly (T=1)."""
    pred_id, pred_rate, hidden_out = decoder_multi_forward_fused(
        params, input_id[None], input_rate[None], hidden, encoder_outputs,
        attn_mask, constraint_vec[None], pro_features, online_features, rid_features[None])
    return pred_id[0], pred_rate[0], hidden_out


# ----------------------------------------------------------------------------
# Pure-JAX reference (mirrors the PyTorch forward exactly, single step)
# ----------------------------------------------------------------------------
def reference_forward(p, input_id, input_rate, hidden, encoder_outputs,
                      attn_mask, constraint_vec, rid_features):
    H = hidden.shape[2]
    ids = input_id[:, 0]
    embedded = p["emb_id"][ids]
    h = hidden[0]
    enc = jnp.transpose(encoder_outputs, (1, 0, 2))
    h_rep = jnp.broadcast_to(h[:, None, :], enc.shape)
    cat = jnp.concatenate([h_rep, enc], axis=2)
    energy = jnp.tanh(cat @ p["attn_w"] + p["attn_b"])
    attention = jnp.sum(energy * p["v_w"], axis=2)
    attention = jnp.where(attn_mask == 0, -1000000.0, attention)
    a = jax.nn.softmax(attention, axis=1)
    weighted = jnp.einsum("bs,bsh->bh", a, enc)
    x = jnp.concatenate([weighted, embedded, input_rate], axis=1)
    gi = x @ p["w_ih"] + p["b_ih"]
    gh = h @ p["w_hh"] + p["b_hh"]
    r = jax.nn.sigmoid(gi[:, :H] + gh[:, :H])
    z = jax.nn.sigmoid(gi[:, H:2 * H] + gh[:, H:2 * H])
    n = jnp.tanh(gi[:, 2 * H:] + r * gh[:, 2 * H:])
    h_new = (1 - z) * n + z * h
    logits = h_new @ p["fc_id_w"] + p["fc_id_b"]
    maxes = jnp.max(logits, axis=1, keepdims=True)
    x_exp = jnp.exp(logits - maxes) * constraint_vec
    s = jnp.sum(x_exp, axis=1, keepdims=True)
    pred = jnp.clip(x_exp / (s + 1e-6), 1e-6, 1.0)
    pred_id = jnp.log(pred)
    max_id = jnp.argmax(pred_id, axis=1)
    id_emb = p["emb_id"][max_id]
    rate_in = jnp.concatenate([id_emb, h_new], axis=1)
    rate_h = jax.nn.relu(rate_in @ p["tandem_w"] + p["tandem_b"])
    rate_full = jnp.concatenate([rate_h, rid_features], axis=1)
    pred_rate = jax.nn.sigmoid(
        jnp.sum(rate_full * p["fc_rate_w"], axis=1, keepdims=True) + p["fc_rate_b"])
    return pred_id, pred_rate, h_new[None]


# ----------------------------------------------------------------------------
# Main
# ----------------------------------------------------------------------------
if __name__ == "__main__":
    B, S, H, ID, R, T = 8, 8, 32, 128, 8, 4

    key = jax.random.PRNGKey(0)
    ks = jax.random.split(key, 24)

    def nrm(k, shape, scale=0.1):
        return jax.random.normal(k, shape, jnp.float32) * scale

    params = {
        "emb_id":    nrm(ks[0], (ID, H), 1.0),
        "attn_w":    nrm(ks[1], (2 * H, H)),
        "attn_b":    nrm(ks[2], (1, H)),
        "v_w":       nrm(ks[3], (1, H)),
        "w_ih":      nrm(ks[4], (2 * H + 1, 3 * H)),
        "b_ih":      nrm(ks[5], (1, 3 * H)),
        "w_hh":      nrm(ks[6], (H, 3 * H)),
        "b_hh":      nrm(ks[7], (1, 3 * H)),
        "fc_id_w":   nrm(ks[8], (H, ID)),
        "fc_id_b":   nrm(ks[9], (1, ID)),
        "tandem_w":  nrm(ks[10], (2 * H, H)),
        "tandem_b":  nrm(ks[11], (1, H)),
        "fc_rate_w": nrm(ks[12], (1, H + R)),
        "fc_rate_b": nrm(ks[13], (1, 1)),
    }

    input_ids = jax.random.randint(ks[14], (T, B, 1), 0, ID, jnp.int32)
    input_rates = jax.random.uniform(ks[15], (T, B, 1), jnp.float32)
    hidden = nrm(ks[16], (1, B, H), 1.0)
    encoder_outputs = nrm(ks[17], (S, B, H), 1.0)
    attn_mask = (jax.random.uniform(ks[18], (B, S)) > 0.3).astype(jnp.float32)
    attn_mask = attn_mask.at[:, 0].set(1.0)
    constraint_vecs = (jax.random.uniform(ks[19], (T, B, ID)) > 0.5).astype(jnp.float32)
    constraint_vecs = constraint_vecs.at[:, :, 0].set(1.0)
    pro_features = nrm(ks[20], (B, 4), 1.0)      # unused in forward
    online_features = nrm(ks[21], (B, 4), 1.0)   # online_features_flag=False
    rid_features = nrm(ks[22], (T, B, R), 1.0)

    # --- single-step call (exact module API, T=1) ---
    pred_id1, pred_rate1, h_out1 = decoder_multi_forward(
        params, input_ids[0], input_rates[0], hidden, encoder_outputs,
        attn_mask, constraint_vecs[0], pro_features, online_features, rid_features[0])
    jax.block_until_ready((pred_id1, pred_rate1, h_out1))

    ref_id1, ref_rate1, ref_h1 = reference_forward(
        params, input_ids[0], input_rates[0], hidden, encoder_outputs,
        attn_mask, constraint_vecs[0], rid_features[0])
    assert pred_id1.shape == (B, ID) and pred_rate1.shape == (B, 1) and h_out1.shape == (1, B, H)
    np.testing.assert_allclose(np.asarray(pred_id1), np.asarray(ref_id1), atol=3e-2, rtol=1e-2)
    np.testing.assert_allclose(np.asarray(h_out1), np.asarray(ref_h1), atol=3e-2, rtol=1e-2)
    np.testing.assert_allclose(np.asarray(pred_rate1), np.asarray(ref_rate1), atol=3e-2, rtol=1e-2)

    # --- fused T-step call (decode loop on the Pallas grid) vs looped reference ---
    pred_ids, pred_rates, h_final = decoder_multi_forward_fused(
        params, input_ids, input_rates, hidden, encoder_outputs,
        attn_mask, constraint_vecs, pro_features, online_features, rid_features)
    jax.block_until_ready((pred_ids, pred_rates, h_final))

    h_ref = hidden
    for t in range(T):
        r_id, r_rate, h_ref = reference_forward(
            params, input_ids[t], input_rates[t], hidden if t == 0 else h_ref, encoder_outputs,
            attn_mask, constraint_vecs[t], rid_features[t])
        np.testing.assert_allclose(np.asarray(pred_ids[t]), np.asarray(r_id), atol=3e-2, rtol=1e-2)
        np.testing.assert_allclose(np.asarray(pred_rates[t]), np.asarray(r_rate), atol=3e-2, rtol=1e-2)
    np.testing.assert_allclose(np.asarray(h_final), np.asarray(h_ref), atol=3e-2, rtol=1e-2)
    assert pred_ids.shape == (T, B, ID) and pred_rates.shape == (T, B, 1) and h_final.shape == (1, B, H)

    print("KERNEL_OK")
</pallas_src>

<mosaic_0001>
module attributes {stable_mosaic.version = 11 : i64} {
  func.func @decoder_step_kernel(%arg0: i32, %arg1: i32, %arg2: memref<8x32xf32, #tpu.memory_space<vmem>>, %arg3: memref<8x8x32xf32, #tpu.memory_space<vmem>>, %arg4: memref<8x8x32xf32, #tpu.memory_space<vmem>>, %arg5: memref<8x8xf32, #tpu.memory_space<vmem>>, %arg6: memref<1x8x128xf32, #tpu.memory_space<vmem>>, %arg7: memref<1x8x128xf32, #tpu.memory_space<vmem>>, %arg8: memref<128x32xf32, #tpu.memory_space<vmem>>, %arg9: memref<32x32xf32, #tpu.memory_space<vmem>>, %arg10: memref<1x32xf32, #tpu.memory_space<vmem>>, %arg11: memref<32x128xf32, #tpu.memory_space<vmem>>, %arg12: memref<32x128xf32, #tpu.memory_space<vmem>>, %arg13: memref<128x128xf32, #tpu.memory_space<vmem>>, %arg14: memref<1x128xf32, #tpu.memory_space<vmem>>, %arg15: memref<32x128xf32, #tpu.memory_space<vmem>>, %arg16: memref<1x128xf32, #tpu.memory_space<vmem>>, %arg17: memref<32x32xf32, #tpu.memory_space<vmem>>, %arg18: memref<32x32xf32, #tpu.memory_space<vmem>>, %arg19: memref<1x32xf32, #tpu.memory_space<vmem>>, %arg20: memref<1x32xf32, #tpu.memory_space<vmem>>, %arg21: memref<1x128xf32, #tpu.memory_space<vmem>>, %arg22: memref<1x8x128xf32, #tpu.memory_space<vmem>>, %arg23: memref<1x8x128xf32, #tpu.memory_space<vmem>>, %arg24: memref<8x32xf32, #tpu.memory_space<vmem>>) attributes {dimension_semantics = [#tpu.dimension_semantics<parallel>, #tpu.dimension_semantics<arbitrary>], iteration_bounds = array<i64: 1, 1>, scalar_prefetch = 0 : i64, scratch_operands = 1 : i64, tpu.core_type = #tpu.core_type<tc>, window_params = [{transform_indices = @transform_0, window_bounds = array<i64: 8, 32>}, {transform_indices = @transform_1, window_bounds = array<i64: 8, 8, 32>}, {transform_indices = @transform_2, window_bounds = array<i64: 8, 8, 32>}, {transform_indices = @transform_3, window_bounds = array<i64: 8, 8>}, {transform_indices = @transform_4, window_bounds = array<i64: 1, 8, 128>}, {transform_indices = @transform_5, window_bounds = array<i64: 1, 8, 128>}, {pipeline_mode = #tpu.pipeline_mode<synchronous>, transform_indices = @transform_6, window_bounds = array<i64: 128, 32>}, {pipeline_mode = #tpu.pipeline_mode<synchronous>, transform_indices = @transform_7, window_bounds = array<i64: 32, 32>}, {pipeline_mode = #tpu.pipeline_mode<synchronous>, transform_indices = @transform_8, window_bounds = array<i64: 1, 32>}, {pipeline_mode = #tpu.pipeline_mode<synchronous>, transform_indices = @transform_9, window_bounds = array<i64: 32, 128>}, {pipeline_mode = #tpu.pipeline_mode<synchronous>, transform_indices = @transform_10, window_bounds = array<i64: 32, 128>}, {pipeline_mode = #tpu.pipeline_mode<synchronous>, transform_indices = @transform_11, window_bounds = array<i64: 128, 128>}, {pipeline_mode = #tpu.pipeline_mode<synchronous>, transform_indices = @transform_12, window_bounds = array<i64: 1, 128>}, {pipeline_mode = #tpu.pipeline_mode<synchronous>, transform_indices = @transform_13, window_bounds = array<i64: 32, 128>}, {pipeline_mode = #tpu.pipeline_mode<synchronous>, transform_indices = @transform_14, window_bounds = array<i64: 1, 128>}, {pipeline_mode = #tpu.pipeline_mode<synchronous>, transform_indices = @transform_15, window_bounds = array<i64: 32, 32>}, {pipeline_mode = #tpu.pipeline_mode<synchronous>, transform_indices = @transform_16, window_bounds = array<i64: 32, 32>}, {pipeline_mode = #tpu.pipeline_mode<synchronous>, transform_indices = @transform_17, window_bounds = array<i64: 1, 32>}, {pipeline_mode = #tpu.pipeline_mode<synchronous>, transform_indices = @transform_18, window_bounds = array<i64: 1, 32>}, {pipeline_mode = #tpu.pipeline_mode<synchronous>, transform_indices = @transform_19, window_bounds = array<i64: 1, 128>}, {transform_indices = @transform_20, window_bounds = array<i64: 1, 8, 128>}, {transform_indices = @transform_21, window_bounds = array<i64: 1, 8, 128>}]} {
    %c0_i32 = arith.constant 0 : i32
    %0 = arith.cmpi eq, %arg1, %c0_i32 : i32
    %1 = arith.extui %0 : i1 to i32
    %c0_i32_0 = arith.constant 0 : i32
    %2 = arith.cmpi ne, %1, %c0_i32_0 : i32
    scf.if %2 {
      %c0_82 = arith.constant 0 : index
      %c0_83 = arith.constant 0 : index
      %151 = vector.load %arg2[%c0_82, %c0_83] : memref<8x32xf32, #tpu.memory_space<vmem>>, vector<8x32xf32>
      %c0_84 = arith.constant 0 : index
      %c0_85 = arith.constant 0 : index
      %152 = vector.load %arg24[%c0_84, %c0_85] : memref<8x32xf32, #tpu.memory_space<vmem>>, vector<8x32xf32>
      tpu.vector_store %arg24[%c0_84, %c0_85], %151 {strides = array<i32>} : memref<8x32xf32, #tpu.memory_space<vmem>>, vector<8x32xf32>,
    } else {
    }
    %c0 = arith.constant 0 : index
    %c0_1 = arith.constant 0 : index
    %3 = vector.load %arg24[%c0, %c0_1] : memref<8x32xf32, #tpu.memory_space<vmem>>, vector<8x32xf32>
    %c0_2 = arith.constant 0 : index
    %c0_3 = arith.constant 0 : index
    %c0_4 = arith.constant 0 : index
    %4 = vector.load %arg6[%c0_2, %c0_3, %c0_4] : memref<1x8x128xf32, #tpu.memory_space<vmem>>, vector<1x8x128xf32>
    %5 = vector.shape_cast %4 : vector<1x8x128xf32> to vector<8x128xf32>
    %c0_5 = arith.constant 0 : index
    %c0_6 = arith.constant 0 : index
    %c0_7 = arith.constant 0 : index
    %6 = vector.load %arg7[%c0_5, %c0_6, %c0_7] : memref<1x8x128xf32, #tpu.memory_space<vmem>>, vector<1x8x128xf32>
    %7 = vector.shape_cast %6 : vector<1x8x128xf32> to vector<8x128xf32>
    %8 = tpu.iota {dimensions = array<i32: 1>} : vector<8x128xi32>
    %c0_8 = arith.constant 0 : index
    %c0_9 = arith.constant 0 : index
    %9 = vector.load %arg9[%c0_8, %c0_9] : memref<32x32xf32, #tpu.memory_space<vmem>>, vector<32x32xf32>
    %cst = arith.constant dense<0.000000e+00> : vector<8x32xf32>
    %10 = tpu.matmul %3, %9, %cst {dimension_numbers = #tpu.dot_dimension_numbers<[1], [0], [0], [1], [0, 0, 1, 1], [], []>} : vector<8x32xf32>, vector<32x32xf32>, vector<8x32xf32> -> vector<8x32xf32>
    %c0_10 = arith.constant 0 : index
    %c0_11 = arith.constant 0 : index
    %c0_12 = arith.constant 0 : index
    %11 = vector.load %arg4[%c0_10, %c0_11, %c0_12] : memref<8x8x32xf32, #tpu.memory_space<vmem>>, vector<8x8x32xf32>
    %12 = vector.shape_cast %10 : vector<8x32xf32> to vector<8x1x32xf32>
    %13 = vector.broadcast %12 : vector<8x1x32xf32> to vector<8x8x32xf32>
    %14 = arith.addf %11, %13 : vector<8x8x32xf32>
    %15 = math.tanh %14 : vector<8x8x32xf32>
    %c0_13 = arith.constant 0 : index
    %c0_14 = arith.constant 0 : index
    %16 = vector.load %arg10[%c0_13, %c0_14] : memref<1x32xf32, #tpu.memory_space<vmem>>, vector<1x32xf32>
    %17 = vector.shape_cast %16 : vector<1x32xf32> to vector<1x1x32xf32>
    %18 = vector.broadcast %17 : vector<1x1x32xf32> to vector<8x8x32xf32>
    %19 = arith.mulf %15, %18 : vector<8x8x32xf32>
    %cst_15 = arith.constant dense<0.000000e+00> : vector<8x8xf32>
    %20 = vector.multi_reduction <add>, %19, %cst_15 [2] : vector<8x8x32xf32> to vector<8x8xf32>
    %c0_16 = arith.constant 0 : index
    %c0_17 = arith.constant 0 : index
    %21 = vector.load %arg5[%c0_16, %c0_17] : memref<8x8xf32, #tpu.memory_space<vmem>>, vector<8x8xf32>
    %cst_18 = arith.constant 0.000000e+00 : f32
    %22 = vector.broadcast %cst_18 : f32 to vector<8x8xf32>
    %23 = arith.cmpf oeq, %21, %22 : vector<8x8xf32>
    %cst_19 = arith.constant -1.000000e+06 : f32
    %24 = vector.broadcast %cst_19 : f32 to vector<8x8xf32>
    %25 = arith.select %23, %24, %20 : vector<8x8xi1>, vector<8x8xf32>
    %cst_20 = arith.constant dense<0xFF800000> : vector<8xf32>
    %26 = vector.multi_reduction <maximumf>, %25, %cst_20 [1] : vector<8x8xf32> to vector<8xf32>
    %27 = vector.shape_cast %26 : vector<8xf32> to vector<8x1xf32>
    %28 = vector.broadcast %27 : vector<8x1xf32> to vector<8x8xf32>
    %29 = arith.subf %25, %28 : vector<8x8xf32>
    %30 = math.exp %29 : vector<8x8xf32>
    %cst_21 = arith.constant dense<0.000000e+00> : vector<8xf32>
    %31 = vector.multi_reduction <add>, %30, %cst_21 [1] : vector<8x8xf32> to vector<8xf32>
    %32 = vector.shape_cast %31 : vector<8xf32> to vector<8x1xf32>
    %33 = tpu.reciprocal %32 {approx = true} : vector<8x1xf32> -> vector<8x1xf32>
    %34 = vector.broadcast %33 : vector<8x1xf32> to vector<8x8xf32>
    %35 = arith.mulf %30, %34 : vector<8x8xf32>
    %36 = vector.shape_cast %35 : vector<8x8xf32> to vector<8x8x1xf32>
    %c0_22 = arith.constant 0 : index
    %c0_23 = arith.constant 0 : index
    %c0_24 = arith.constant 0 : index
    %37 = vector.load %arg3[%c0_22, %c0_23, %c0_24] : memref<8x8x32xf32, #tpu.memory_space<vmem>>, vector<8x8x32xf32>
    %38 = vector.broadcast %36 : vector<8x8x1xf32> to vector<8x8x32xf32>
    %39 = arith.mulf %38, %37 : vector<8x8x32xf32>
    %cst_25 = arith.constant dense<0.000000e+00> : vector<8x32xf32>
    %40 = vector.multi_reduction <add>, %39, %cst_25 [1] : vector<8x8x32xf32> to vector<8x32xf32>
    %c0_26 = arith.constant 0 : index
    %c0_27 = arith.constant 0 : index
    %41 = vector.load %arg11[%c0_26, %c0_27] : memref<32x128xf32, #tpu.memory_space<vmem>>, vector<32x128xf32>
    %cst_28 = arith.constant dense<0.000000e+00> : vector<8x128xf32>
    %42 = tpu.matmul %40, %41, %cst_28 {dimension_numbers = #tpu.dot_dimension_numbers<[1], [0], [0], [1], [0, 0, 1, 1], [], []>} : vector<8x32xf32>, vector<32x128xf32>, vector<8x128xf32> -> vector<8x128xf32>
    %c0_29 = arith.constant 0 : index
    %c0_30 = arith.constant 0 : index
    %43 = vector.load %arg12[%c0_29, %c0_30] : memref<32x128xf32, #tpu.memory_space<vmem>>, vector<32x128xf32>
    %cst_31 = arith.constant dense<0.000000e+00> : vector<8x128xf32>
    %44 = tpu.matmul %3, %43, %cst_31 {dimension_numbers = #tpu.dot_dimension_numbers<[1], [0], [0], [1], [0, 0, 1, 1], [], []>} : vector<8x32xf32>, vector<32x128xf32>, vector<8x128xf32> -> vector<8x128xf32>
    %45 = arith.addf %42, %44 : vector<8x128xf32>
    %c0_32 = arith.constant 0 : index
    %c0_33 = arith.constant 0 : index
    %46 = vector.load %arg13[%c0_32, %c0_33] : memref<128x128xf32, #tpu.memory_space<vmem>>, vector<128x128xf32>
    %cst_34 = arith.constant dense<0.000000e+00> : vector<8x128xf32>
    %47 = tpu.matmul %5, %46, %cst_34 {dimension_numbers = #tpu.dot_dimension_numbers<[1], [0], [0], [1], [0, 0, 1, 1], [], []>} : vector<8x128xf32>, vector<128x128xf32>, vector<8x128xf32> -> vector<8x128xf32>
    %48 = arith.addf %45, %47 : vector<8x128xf32>
    %c0_35 = arith.constant 0 : index
    %c0_36 = arith.constant 0 : index
    %49 = vector.load %arg14[%c0_35, %c0_36] : memref<1x128xf32, #tpu.memory_space<vmem>>, vector<1x128xf32>
    %50 = vector.broadcast %49 : vector<1x128xf32> to vector<8x128xf32>
    %51 = arith.addf %48, %50 : vector<8x128xf32>
    %52 = vector.extract_strided_slice %51 {offsets = [0, 0], sizes = [8, 32], strides = [1, 1]} : vector<8x128xf32> to vector<8x32xf32>
    %53 = arith.negf %52 : vector<8x32xf32>
    %54 = math.exp %53 : vector<8x32xf32>
    %cst_37 = arith.constant 1.000000e+00 : f32
    %55 = vector.broadcast %cst_37 : f32 to vector<8x32xf32>
    %56 = arith.addf %55, %54 : vector<8x32xf32>
    %57 = arith.divf %55, %56 : vector<8x32xf32>
    %58 = vector.extract_strided_slice %51 {offsets = [0, 32], sizes = [8, 32], strides = [1, 1]} : vector<8x128xf32> to vector<8x32xf32>
    %59 = arith.negf %58 : vector<8x32xf32>
    %60 = math.exp %59 : vector<8x32xf32>
    %cst_38 = arith.constant 1.000000e+00 : f32
    %61 = vector.broadcast %cst_38 : f32 to vector<8x32xf32>
    %62 = arith.addf %61, %60 : vector<8x32xf32>
    %63 = arith.divf %61, %62 : vector<8x32xf32>
    %64 = vector.extract_strided_slice %51 {offsets = [0, 64], sizes = [8, 32], strides = [1, 1]} : vector<8x128xf32> to vector<8x32xf32>
    %65 = vector.extract_strided_slice %51 {offsets = [0, 96], sizes = [8, 32], strides = [1, 1]} : vector<8x128xf32> to vector<8x32xf32>
    %66 = arith.mulf %57, %65 : vector<8x32xf32>
    %67 = arith.addf %64, %66 : vector<8x32xf32>
    %68 = math.tanh %67 : vector<8x32xf32>
    %cst_39 = arith.constant 1.000000e+00 : f32
    %69 = vector.broadcast %cst_39 : f32 to vector<8x32xf32>
    %70 = arith.subf %69, %63 : vector<8x32xf32>
    %71 = arith.mulf %70, %68 : vector<8x32xf32>
    %72 = arith.mulf %63, %3 : vector<8x32xf32>
    %73 = arith.addf %71, %72 : vector<8x32xf32>
    %c0_40 = arith.constant 0 : index
    %c0_41 = arith.constant 0 : index
    %74 = vector.load %arg15[%c0_40, %c0_41] : memref<32x128xf32, #tpu.memory_space<vmem>>, vector<32x128xf32>
    %cst_42 = arith.constant dense<0.000000e+00> : vector<8x128xf32>
    %75 = tpu.matmul %73, %74, %cst_42 {dimension_numbers = #tpu.dot_dimension_numbers<[1], [0], [0], [1], [0, 0, 1, 1], [], []>} : vector<8x32xf32>, vector<32x128xf32>, vector<8x128xf32> -> vector<8x128xf32>
    %c0_43 = arith.constant 0 : index
    %c0_44 = arith.constant 0 : index
    %76 = vector.load %arg16[%c0_43, %c0_44] : memref<1x128xf32, #tpu.memory_space<vmem>>, vector<1x128xf32>
    %77 = vector.broadcast %76 : vector<1x128xf32> to vector<8x128xf32>
    %78 = arith.addf %75, %77 : vector<8x128xf32>
    %cst_45 = arith.constant dense<0xFF800000> : vector<8xf32>
    %79 = vector.multi_reduction <maximumf>, %78, %cst_45 [1] : vector<8x128xf32> to vector<8xf32>
    %80 = vector.shape_cast %79 : vector<8xf32> to vector<8x1xf32>
    %81 = vector.broadcast %80 : vector<8x1xf32> to vector<8x128xf32>
    %82 = arith.subf %78, %81 : vector<8x128xf32>
    %83 = math.exp %82 : vector<8x128xf32>
    %84 = arith.mulf %83, %7 : vector<8x128xf32>
    %cst_46 = arith.constant dense<0.000000e+00> : vector<8xf32>
    %85 = vector.multi_reduction <add>, %84, %cst_46 [1] : vector<8x128xf32> to vector<8xf32>
    %86 = vector.shape_cast %85 : vector<8xf32> to vector<8x1xf32>
    %cst_47 = arith.constant 9.99999997E-7 : f32
    %87 = vector.broadcast %cst_47 : f32 to vector<8x1xf32>
    %88 = arith.addf %86, %87 : vector<8x1xf32>
    %89 = math.log %88 : vector<8x1xf32>
    %cst_48 = arith.constant 0.000000e+00 : f32
    %90 = vector.broadcast %cst_48 : f32 to vector<8x128xf32>
    %91 = arith.cmpf one, %7, %90 : vector<8x128xf32>
    %92 = vector.broadcast %80 : vector<8x1xf32> to vector<8x128xf32>
    %93 = arith.subf %78, %92 : vector<8x128xf32>
    %94 = vector.broadcast %89 : vector<8x1xf32> to vector<8x128xf32>
    %95 = arith.subf %93, %94 : vector<8x128xf32>
    %cst_49 = arith.constant -13.8155107 : f32
    %cst_50 = arith.constant 0.000000e+00 : f32
    %96 = vector.broadcast %cst_49 : f32 to vector<8x128xf32>
    %97 = arith.maximumf %96, %95 : vector<8x128xf32>
    %98 = vector.broadcast %cst_50 : f32 to vector<8x128xf32>
    %99 = arith.minimumf %98, %97 : vector<8x128xf32>
    %cst_51 = arith.constant -13.8155107 : f32
    %100 = vector.broadcast %cst_51 : f32 to vector<8x128xf32>
    %101 = arith.select %91, %99, %100 : vector<8x128xi1>, vector<8x128xf32>
    %cst_52 = arith.constant dense<0xFF800000> : vector<8xf32>
    %102 = vector.multi_reduction <maximumf>, %101, %cst_52 [1] : vector<8x128xf32> to vector<8xf32>
    %103 = vector.shape_cast %102 : vector<8xf32> to vector<8x1xf32>
    %104 = vector.broadcast %103 : vector<8x1xf32> to vector<8x128xf32>
    %105 = arith.cmpf oeq, %101, %104 : vector<8x128xf32>
    %c128_i32 = arith.constant 128 : i32
    %106 = vector.broadcast %c128_i32 : i32 to vector<8x128xi32>
    %107 = arith.select %105, %8, %106 : vector<8x128xi1>, vector<8x128xi32>
    %cst_53 = arith.constant dense<2147483647> : vector<8xi32>
    %108 = vector.multi_reduction <minsi>, %107, %cst_53 [1] : vector<8x128xi32> to vector<8xi32>
    %109 = vector.shape_cast %108 : vector<8xi32> to vector<8x1xi32>
    %110 = vector.broadcast %109 : vector<8x1xi32> to vector<8x128xi32>
    %111 = arith.cmpi eq, %8, %110 : vector<8x128xi32>
    %112 = arith.extui %111 : vector<8x128xi1> to vector<8x128xi32>
    %113 = arith.sitofp %112 : vector<8x128xi32> to vector<8x128xf32>
    %c0_54 = arith.constant 0 : index
    %c0_55 = arith.constant 0 : index
    %114 = vector.load %arg8[%c0_54, %c0_55] : memref<128x32xf32, #tpu.memory_space<vmem>>, vector<128x32xf32>
    %cst_56 = arith.constant dense<0.000000e+00> : vector<8x32xf32>
    %115 = tpu.matmul %113, %114, %cst_56 {dimension_numbers = #tpu.dot_dimension_numbers<[1], [0], [0], [1], [0, 0, 1, 1], [], []>} : vector<8x128xf32>, vector<128x32xf32>, vector<8x32xf32> -> vector<8x32xf32>
    %c0_57 = arith.constant 0 : index
    %c0_58 = arith.constant 0 : index
    %116 = vector.load %arg17[%c0_57, %c0_58] : memref<32x32xf32, #tpu.memory_space<vmem>>, vector<32x32xf32>
    %cst_59 = arith.constant dense<0.000000e+00> : vector<8x32xf32>
    %117 = tpu.matmul %115, %116, %cst_59 {dimension_numbers = #tpu.dot_dimension_numbers<[1], [0], [0], [1], [0, 0, 1, 1], [], []>} : vector<8x32xf32>, vector<32x32xf32>, vector<8x32xf32> -> vector<8x32xf32>
    %c0_60 = arith.constant 0 : index
    %c0_61 = arith.constant 0 : index
    %118 = vector.load %arg18[%c0_60, %c0_61] : memref<32x32xf32, #tpu.memory_space<vmem>>, vector<32x32xf32>
    %cst_62 = arith.constant dense<0.000000e+00> : vector<8x32xf32>
    %119 = tpu.matmul %73, %118, %cst_62 {dimension_numbers = #tpu.dot_dimension_numbers<[1], [0], [0], [1], [0, 0, 1, 1], [], []>} : vector<8x32xf32>, vector<32x32xf32>, vector<8x32xf32> -> vector<8x32xf32>
    %120 = arith.addf %117, %119 : vector<8x32xf32>
    %c0_63 = arith.constant 0 : index
    %c0_64 = arith.constant 0 : index
    %121 = vector.load %arg19[%c0_63, %c0_64] : memref<1x32xf32, #tpu.memory_space<vmem>>, vector<1x32xf32>
    %122 = vector.broadcast %121 : vector<1x32xf32> to vector<8x32xf32>
    %123 = arith.addf %120, %122 : vector<8x32xf32>
    %cst_65 = arith.constant 0.000000e+00 : f32
    %124 = vector.broadcast %cst_65 : f32 to vector<8x32xf32>
    %125 = arith.maximumf %123, %124 : vector<8x32xf32>
    %c0_66 = arith.constant 0 : index
    %c0_67 = arith.constant 0 : index
    %126 = vector.load %arg20[%c0_66, %c0_67] : memref<1x32xf32, #tpu.memory_space<vmem>>, vector<1x32xf32>
    %127 = vector.broadcast %126 : vector<1x32xf32> to vector<8x32xf32>
    %128 = arith.mulf %125, %127 : vector<8x32xf32>
    %cst_68 = arith.constant dense<0.000000e+00> : vector<8xf32>
    %129 = vector.multi_reduction <add>, %128, %cst_68 [1] : vector<8x32xf32> to vector<8xf32>
    %130 = vector.shape_cast %129 : vector<8xf32> to vector<8x1xf32>
    %c0_69 = arith.constant 0 : index
    %c0_70 = arith.constant 0 : index
    %131 = vector.load %arg21[%c0_69, %c0_70] : memref<1x128xf32, #tpu.memory_space<vmem>>, vector<1x128xf32>
    %132 = vector.broadcast %131 : vector<1x128xf32> to vector<8x128xf32>
    %133 = arith.mulf %5, %132 : vector<8x128xf32>
    %cst_71 = arith.constant dense<0.000000e+00> : vector<8xf32>
    %134 = vector.multi_reduction <add>, %133, %cst_71 [1] : vector<8x128xf32> to vector<8xf32>
    %135 = vector.shape_cast %134 : vector<8xf32> to vector<8x1xf32>
    %136 = arith.addf %130, %135 : vector<8x1xf32>
    %137 = arith.negf %136 : vector<8x1xf32>
    %138 = math.exp %137 : vector<8x1xf32>
    %cst_72 = arith.constant 1.000000e+00 : f32
    %139 = vector.broadcast %cst_72 : f32 to vector<8x1xf32>
    %140 = arith.addf %139, %138 : vector<8x1xf32>
    %141 = arith.divf %139, %140 : vector<8x1xf32>
    %c0_73 = arith.constant 0 : index
    %c0_74 = arith.constant 0 : index
    %c0_75 = arith.constant 0 : index
    %142 = vector.load %arg22[%c0_73, %c0_74, %c0_75] : memref<1x8x128xf32, #tpu.memory_space<vmem>>, vector<1x8x128xf32>
    %143 = vector.shape_cast %142 : vector<1x8x128xf32> to vector<8x128xf32>
    %144 = vector.shape_cast %101 : vector<8x128xf32> to vector<1x8x128xf32>
    tpu.vector_store %arg22[%c0_73, %c0_74, %c0_75], %144 {strides = array<i32>} : memref<1x8x128xf32, #tpu.memory_space<vmem>>, vector<1x8x128xf32>,
    %cst_76 = arith.constant 0.000000e+00 : f32
    %145 = vector.broadcast %cst_76 : f32 to vector<8x95xf32>
    %146 = tpu.concatenate %73, %141, %145 in 1 : vector<8x32xf32>, vector<8x1xf32>, vector<8x95xf32> -> vector<8x128xf32>
    %c0_77 = arith.constant 0 : index
    %c0_78 = arith.constant 0 : index
    %c0_79 = arith.constant 0 : index
    %147 = vector.load %arg23[%c0_77, %c0_78, %c0_79] : memref<1x8x128xf32, #tpu.memory_space<vmem>>, vector<1x8x128xf32>
    %148 = vector.shape_cast %147 : vector<1x8x128xf32> to vector<8x128xf32>
    %149 = vector.shape_cast %146 : vector<8x128xf32> to vector<1x8x128xf32>
    tpu.vector_store %arg23[%c0_77, %c0_78, %c0_79], %149 {strides = array<i32>} : memref<1x8x128xf32, #tpu.memory_space<vmem>>, vector<1x8x128xf32>,
    %c0_80 = arith.constant 0 : index
    %c0_81 = arith.constant 0 : index
    %150 = vector.load %arg24[%c0_80, %c0_81] : memref<8x32xf32, #tpu.memory_space<vmem>>, vector<8x32xf32>
    tpu.vector_store %arg24[%c0_80, %c0_81], %73 {strides = array<i32>} : memref<8x32xf32, #tpu.memory_space<vmem>>, vector<8x32xf32>,
    return
  }
  func.func @transform_0(%arg0: i32, %arg1: i32) -> (i32, i32) {
    %c0_i32 = arith.constant 0 : i32
    %c0_i32_0 = arith.constant 0 : i32
    return %arg0, %c0_i32 : i32, i32
  }
  func.func @transform_1(%arg0: i32, %arg1: i32) -> (i32, i32, i32) {
    %c0_i32 = arith.constant 0 : i32
    %c0_i32_0 = arith.constant 0 : i32
    %c0_i32_1 = arith.constant 0 : i32
    return %arg0, %c0_i32, %c0_i32_0 : i32, i32, i32
  }
  func.func @transform_2(%arg0: i32, %arg1: i32) -> (i32, i32, i32) {
    %c0_i32 = arith.constant 0 : i32
    %c0_i32_0 = arith.constant 0 : i32
    %c0_i32_1 = arith.constant 0 : i32
    return %arg0, %c0_i32, %c0_i32_0 : i32, i32, i32
  }
  func.func @transform_3(%arg0: i32, %arg1: i32) -> (i32, i32) {
    %c0_i32 = arith.constant 0 : i32
    %c0_i32_0 = arith.constant 0 : i32
    return %arg0, %c0_i32 : i32, i32
  }
  func.func @transform_4(%arg0: i32, %arg1: i32) -> (i32, i32, i32) {
    %c0_i32 = arith.constant 0 : i32
    %c0_i32_0 = arith.constant 0 : i32
    return %arg1, %arg0, %c0_i32 : i32, i32, i32
  }
  func.func @transform_5(%arg0: i32, %arg1: i32) -> (i32, i32, i32) {
    %c0_i32 = arith.constant 0 : i32
    %c0_i32_0 = arith.constant 0 : i32
    return %arg1, %arg0, %c0_i32 : i32, i32, i32
  }
  func.func @transform_6(%arg0: i32, %arg1: i32) -> (i32, i32) {
    %c0_i32 = arith.constant 0 : i32
    %c0_i32_0 = arith.constant 0 : i32
    %c0_i32_1 = arith.constant 0 : i32
    return %c0_i32, %c0_i32_0 : i32, i32
  }
  func.func @transform_7(%arg0: i32, %arg1: i32) -> (i32, i32) {
    %c0_i32 = arith.constant 0 : i32
    %c0_i32_0 = arith.constant 0 : i32
    %c0_i32_1 = arith.constant 0 : i32
    return %c0_i32, %c0_i32_0 : i32, i32
  }
  func.func @transform_8(%arg0: i32, %arg1: i32) -> (i32, i32) {
    %c0_i32 = arith.constant 0 : i32
    %c0_i32_0 = arith.constant 0 : i32
    %c0_i32_1 = arith.constant 0 : i32
    return %c0_i32, %c0_i32_0 : i32, i32
  }
  func.func @transform_9(%arg0: i32, %arg1: i32) -> (i32, i32) {
    %c0_i32 = arith.constant 0 : i32
    %c0_i32_0 = arith.constant 0 : i32
    %c0_i32_1 = arith.constant 0 : i32
    return %c0_i32, %c0_i32_0 : i32, i32
  }
  func.func @transform_10(%arg0: i32, %arg1: i32) -> (i32, i32) {
    %c0_i32 = arith.constant 0 : i32
    %c0_i32_0 = arith.constant 0 : i32
    %c0_i32_1 = arith.constant 0 : i32
    return %c0_i32, %c0_i32_0 : i32, i32
  }
  func.func @transform_11(%arg0: i32, %arg1: i32) -> (i32, i32) {
    %c0_i32 = arith.constant 0 : i32
    %c0_i32_0 = arith.constant 0 : i32
    %c0_i32_1 = arith.constant 0 : i32
    return %c0_i32, %c0_i32_0 : i32, i32
  }
  func.func @transform_12(%arg0: i32, %arg1: i32) -> (i32, i32) {
    %c0_i32 = arith.constant 0 : i32
    %c0_i32_0 = arith.constant 0 : i32
    %c0_i32_1 = arith.constant 0 : i32
    return %c0_i32, %c0_i32_0 : i32, i32
  }
  func.func @transform_13(%arg0: i32, %arg1: i32) -> (i32, i32) {
    %c0_i32 = arith.constant 0 : i32
    %c0_i32_0 = arith.constant 0 : i32
    %c0_i32_1 = arith.constant 0 : i32
    return %c0_i32, %c0_i32_0 : i32, i32
  }
  func.func @transform_14(%arg0: i32, %arg1: i32) -> (i32, i32) {
    %c0_i32 = arith.constant 0 : i32
    %c0_i32_0 = arith.constant 0 : i32
    %c0_i32_1 = arith.constant 0 : i32
    return %c0_i32, %c0_i32_0 : i32, i32
  }
  func.func @transform_15(%arg0: i32, %arg1: i32) -> (i32, i32) {
    %c0_i32 = arith.constant 0 : i32
    %c0_i32_0 = arith.constant 0 : i32
    %c0_i32_1 = arith.constant 0 : i32
    return %c0_i32, %c0_i32_0 : i32, i32
  }
  func.func @transform_16(%arg0: i32, %arg1: i32) -> (i32, i32) {
    %c0_i32 = arith.constant 0 : i32
    %c0_i32_0 = arith.constant 0 : i32
    %c0_i32_1 = arith.constant 0 : i32
    return %c0_i32, %c0_i32_0 : i32, i32
  }
  func.func @transform_17(%arg0: i32, %arg1: i32) -> (i32, i32) {
    %c0_i32 = arith.constant 0 : i32
    %c0_i32_0 = arith.constant 0 : i32
    %c0_i32_1 = arith.constant 0 : i32
    return %c0_i32, %c0_i32_0 : i32, i32
  }
  func.func @transform_18(%arg0: i32, %arg1: i32) -> (i32, i32) {
    %c0_i32 = arith.constant 0 : i32
    %c0_i32_0 = arith.constant 0 : i32
    %c0_i32_1 = arith.constant 0 : i32
    return %c0_i32, %c0_i32_0 : i32, i32
  }
  func.func @transform_19(%arg0: i32, %arg1: i32) -> (i32, i32) {
    %c0_i32 = arith.constant 0 : i32
    %c0_i32_0 = arith.constant 0 : i32
    %c0_i32_1 = arith.constant 0 : i32
    return %c0_i32, %c0_i32_0 : i32, i32
  }
  func.func @transform_20(%arg0: i32, %arg1: i32) -> (i32, i32, i32) {
    %c0_i32 = arith.constant 0 : i32
    %c0_i32_0 = arith.constant 0 : i32
    return %arg1, %arg0, %c0_i32 : i32, i32, i32
  }
  func.func @transform_21(%arg0: i32, %arg1: i32) -> (i32, i32, i32) {
    %c0_i32 = arith.constant 0 : i32
    %c0_i32_0 = arith.constant 0 : i32
    return %arg1, %arg0, %c0_i32 : i32, i32, i32
  }
}

</mosaic_0001>

<llo_original>
// kernel: decoder_multi_forward_fused.1
$region0: #{decoder_multi_forward_fused.1}
  #allocation0 [shape = 'u32[]', space=smem, size = 0x4, offset = 0x4, fixed_abs, tag = 'smem constant byte address 0x4 - core index']
  #allocation1 [shape = 'u32[144,128]{1,0:T(1,128)}', space=vmem, size = 0x12000, scoped, tag = 'internal scratch']
  #allocation2 [shape = 'f32[8,32]{1,0:T(8,128)}', space=vmem, size = 0x1000, scoped, tag = 'scratch operand']
  %s0 = inlined_call_operand.vmem [shape: f32[8,32], index: 0, kind: input, shape index: {}]
  %s1 = inlined_call_operand.vmem [shape: f32[8,8,32], index: 1, kind: input, shape index: {}]
  %s2 = inlined_call_operand.vmem [shape: f32[8,8,32], index: 2, kind: input, shape index: {}]
  %s3 = inlined_call_operand.vmem [shape: f32[8,8], index: 3, kind: input, shape index: {}]
  %s4 = inlined_call_operand.vmem [shape: f32[1,8,128], index: 4, kind: input, shape index: {}]
  %s5 = inlined_call_operand.vmem [shape: f32[1,8,128], index: 5, kind: input, shape index: {}]
  %s6 = inlined_call_operand.vmem [shape: f32[128,32], index: 6, kind: input, shape index: {}]
  %s7 = inlined_call_operand.vmem [shape: f32[32,32], index: 7, kind: input, shape index: {}]
  %s8 = inlined_call_operand.vmem [shape: f32[1,32], index: 8, kind: input, shape index: {}]
  %s9 = inlined_call_operand.vmem [shape: f32[32,128], index: 9, kind: input, shape index: {}]
  %s10 = inlined_call_operand.vmem [shape: f32[32,128], index: 10, kind: input, shape index: {}]
  %s11 = inlined_call_operand.vmem [shape: f32[128,128], index: 11, kind: input, shape index: {}]
  %s12 = inlined_call_operand.vmem [shape: f32[1,128], index: 12, kind: input, shape index: {}]
  %s13 = inlined_call_operand.vmem [shape: f32[32,128], index: 13, kind: input, shape index: {}]
  %s14 = inlined_call_operand.vmem [shape: f32[1,128], index: 14, kind: input, shape index: {}]
  %s15 = inlined_call_operand.vmem [shape: f32[32,32], index: 15, kind: input, shape index: {}]
  %s16 = inlined_call_operand.vmem [shape: f32[32,32], index: 16, kind: input, shape index: {}]
  %s17 = inlined_call_operand.vmem [shape: f32[1,32], index: 17, kind: input, shape index: {}]
  %s18 = inlined_call_operand.vmem [shape: f32[1,32], index: 18, kind: input, shape index: {}]
  %s19 = inlined_call_operand.vmem [shape: f32[1,128], index: 19, kind: input, shape index: {}]
  %s20 = inlined_call_operand.hbm [shape: f32[1,8,128], index: 20, kind: output, shape index: {0}]
  %s21 = inlined_call_operand.vmem [shape: f32[1,8,128], index: 21, kind: output, shape index: {1}]
  %22 = xla_tuple %s20, %s21
  %s23 = sld [smem:[#allocation0]]
  $region102: #{decoder_multi_forward_fused.1} parent=0
    _
  %s25 = ssub.s32 1, %s23
  %s26 = scalar_select 0, %s25, %s23
  $region1: #{decoder_multi_forward_fused.1} parent=0
    #allocation3 [shape = 'u8[4096]{0}', space=vmem, size = 0x1000, scoped, tag = 'output window, operand 0, single buffered']
    #allocation4 [shape = 's32[1]{0}', space=sflag, size = 0x4, scoped, tag = 'scoped memory for decoder_multi_forward_fused.1']
    %27 = vsyncpa [#allocation4], 0
    // Predicated region
    $region2: #{decoder_multi_forward_fused.1} parent=1 // pred_check
      _
    $region3: #{decoder_multi_forward_fused.1} parent=1 // pred_check_branch
      %29 = sbr.rel (0) target = $region5
    $region4: #{decoder_multi_forward_fused.1} parent=1 // pred_region
      _
    $region5: #{decoder_multi_forward_fused.1} parent=1 // pred_fallthru
      _
    // Predicated region
    $region6: #{decoder_multi_forward_fused.1} parent=1 // pred_check
      _
    $region7: #{decoder_multi_forward_fused.1} parent=1 // pred_check_branch
      %31 = sbr.rel (0) target = $region9
    $region8: #{decoder_multi_forward_fused.1} parent=1 // pred_region
      _
    $region9: #{decoder_multi_forward_fused.1} parent=1 // pred_fallthru
      _
    // Predicated region
    $region10: #{decoder_multi_forward_fused.1} parent=1 // pred_check
      _
    $region11: #{decoder_multi_forward_fused.1} parent=1 // pred_check_branch
      %33 = sbr.rel (0) target = $region13
    $region12: #{decoder_multi_forward_fused.1} parent=1 // pred_region
      _
    $region13: #{decoder_multi_forward_fused.1} parent=1 // pred_fallthru
      _
    // Predicated region
    $region14: #{decoder_multi_forward_fused.1} parent=1 // pred_check
      _
    $region15: #{decoder_multi_forward_fused.1} parent=1 // pred_check_branch
      %35 = sbr.rel (0) target = $region17
    $region16: #{decoder_multi_forward_fused.1} parent=1 // pred_region
      _
    $region17: #{decoder_multi_forward_fused.1} parent=1 // pred_fallthru
      _
    // Predicated region
    $region18: #{decoder_multi_forward_fused.1} parent=1 // pred_check
      _
    $region19: #{decoder_multi_forward_fused.1} parent=1 // pred_check_branch
      %37 = sbr.rel (0) target = $region21
    $region20: #{decoder_multi_forward_fused.1} parent=1 // pred_region
      _
    $region21: #{decoder_multi_forward_fused.1} parent=1 // pred_fallthru
      _
    // Predicated region
    $region22: #{decoder_multi_forward_fused.1} parent=1 // pred_check
      _
    $region23: #{decoder_multi_forward_fused.1} parent=1 // pred_check_branch
      %39 = sbr.rel (0) target = $region25
    $region24: #{decoder_multi_forward_fused.1} parent=1 // pred_region
      _
    $region25: #{decoder_multi_forward_fused.1} parent=1 // pred_fallthru
      _
    // Predicated region
    $region26: #{decoder_multi_forward_fused.1} parent=1 // pred_check
      _
    $region27: #{decoder_multi_forward_fused.1} parent=1 // pred_check_branch
      %41 = sbr.rel (0) target = $region29
    $region28: #{decoder_multi_forward_fused.1} parent=1 // pred_region
      _
    $region29: #{decoder_multi_forward_fused.1} parent=1 // pred_fallthru
      _
    // Predicated region
    $region30: #{decoder_multi_forward_fused.1} parent=1 // pred_check
      _
    $region31: #{decoder_multi_forward_fused.1} parent=1 // pred_check_branch
      %43 = sbr.rel (0) target = $region33
    $region32: #{decoder_multi_forward_fused.1} parent=1 // pred_region
      _
    $region33: #{decoder_multi_forward_fused.1} parent=1 // pred_fallthru
      _
    // Predicated region
    $region34: #{decoder_multi_forward_fused.1} parent=1 // pred_check
      _
    $region35: #{decoder_multi_forward_fused.1} parent=1 // pred_check_branch
      %45 = sbr.rel (0) target = $region37
    $region36: #{decoder_multi_forward_fused.1} parent=1 // pred_region
      _
    $region37: #{decoder_multi_forward_fused.1} parent=1 // pred_fallthru
      _
    // Predicated region
    $region38: #{decoder_multi_forward_fused.1} parent=1 // pred_check
      _
    $region39: #{decoder_multi_forward_fused.1} parent=1 // pred_check_branch
      %47 = sbr.rel (0) target = $region41
    $region40: #{decoder_multi_forward_fused.1} parent=1 // pred_region
      _
    $region41: #{decoder_multi_forward_fused.1} parent=1 // pred_fallthru
      _
    // Predicated region
    $region42: #{decoder_multi_forward_fused.1} parent=1 // pred_check
      _
    $region43: #{decoder_multi_forward_fused.1} parent=1 // pred_check_branch
      %49 = sbr.rel (0) target = $region45
    $region44: #{decoder_multi_forward_fused.1} parent=1 // pred_region
      _
    $region45: #{decoder_multi_forward_fused.1} parent=1 // pred_fallthru
      _
    // Predicated region
    $region46: #{decoder_multi_forward_fused.1} parent=1 // pred_check
      _
    $region47: #{decoder_multi_forward_fused.1} parent=1 // pred_check_branch
      %51 = sbr.rel (0) target = $region49
    $region48: #{decoder_multi_forward_fused.1} parent=1 // pred_region
      _
    $region49: #{decoder_multi_forward_fused.1} parent=1 // pred_fallthru
      _
    // Predicated region
    $region50: #{decoder_multi_forward_fused.1} parent=1 // pred_check
      _
    $region51: #{decoder_multi_forward_fused.1} parent=1 // pred_check_branch
      %53 = sbr.rel (0) target = $region53
    $region52: #{decoder_multi_forward_fused.1} parent=1 // pred_region
      _
    $region53: #{decoder_multi_forward_fused.1} parent=1 // pred_fallthru
      _
    // Predicated region
    $region54: #{decoder_multi_forward_fused.1} parent=1 // pred_check
      _
    $region55: #{decoder_multi_forward_fused.1} parent=1 // pred_check_branch
      %55 = sbr.rel (0) target = $region57
    $region56: #{decoder_multi_forward_fused.1} parent=1 // pred_region
      _
    $region57: #{decoder_multi_forward_fused.1} parent=1 // pred_fallthru
      _
    // Predicated region
    $region58: #{decoder_multi_forward_fused.1} parent=1 // pred_check
      _
    $region59: #{decoder_multi_forward_fused.1} parent=1 // pred_check_branch
      %57 = sbr.rel (0) target = $region61
    $region60: #{decoder_multi_forward_fused.1} parent=1 // pred_region
      _
    $region61: #{decoder_multi_forward_fused.1} parent=1 // pred_fallthru
      _
    // Predicated region
    $region62: #{decoder_multi_forward_fused.1} parent=1 // pred_check
      _
    $region63: #{decoder_multi_forward_fused.1} parent=1 // pred_check_branch
      %59 = sbr.rel (0) target = $region65
    $region64: #{decoder_multi_forward_fused.1} parent=1 // pred_region
      _
    $region65: #{decoder_multi_forward_fused.1} parent=1 // pred_fallthru
      _
    // Predicated region
    $region66: #{decoder_multi_forward_fused.1} parent=1 // pred_check
      _
    $region67: #{decoder_multi_forward_fused.1} parent=1 // pred_check_branch
      %61 = sbr.rel (0) target = $region69
    $region68: #{decoder_multi_forward_fused.1} parent=1 // pred_region
      _
    $region69: #{decoder_multi_forward_fused.1} parent=1 // pred_fallthru
      _
    // Predicated region
    $region70: #{decoder_multi_forward_fused.1} parent=1 // pred_check
      _
    $region71: #{decoder_multi_forward_fused.1} parent=1 // pred_check_branch
      %63 = sbr.rel (0) target = $region73
    $region72: #{decoder_multi_forward_fused.1} parent=1 // pred_region
      _
    $region73: #{decoder_multi_forward_fused.1} parent=1 // pred_fallthru
      _
    // Predicated region
    $region74: #{decoder_multi_forward_fused.1} parent=1 // pred_check
      _
    $region75: #{decoder_multi_forward_fused.1} parent=1 // pred_check_branch
      %65 = sbr.rel (0) target = $region77
    $region76: #{decoder_multi_forward_fused.1} parent=1 // pred_region
      _
    $region77: #{decoder_multi_forward_fused.1} parent=1 // pred_fallthru
      _
    // Predicated region
    $region78: #{decoder_multi_forward_fused.1} parent=1 // pred_check
      _
    $region79: #{decoder_multi_forward_fused.1} parent=1 // pred_check_branch
      %67 = sbr.rel (0) target = $region81
    $region80: #{decoder_multi_forward_fused.1} parent=1 // pred_region
      _
    $region81: #{decoder_multi_forward_fused.1} parent=1 // pred_fallthru
      _
    %p68 = scmp.eq.s32.totalorder 0, 0
    // Predicated region
    $region82: #{decoder_multi_forward_fused.1} parent=1 // pred_check
      %p69 = pneg %p68
    $region83: #{decoder_multi_forward_fused.1} parent=1 // pred_check_branch
      %71 = sbr.rel (%p69) target = $region85
    $region84: #{decoder_multi_forward_fused.1} parent=1 // pred_region
      %v72 = vld [vmem:[%s0] sm:$0xff]
      %vm73 = vcmask 261120
      %74 = vst.msk [vmem:[#allocation2] sm:$0xff] %vm73, %v72
    $region85: #{decoder_multi_forward_fused.1} parent=1 // pred_fallthru
      _
    %v75 = vld [vmem:[#allocation2] sm:$0xff]
    %v76 = vld [vmem:[%s4] sm:$0xff]
    %v77 = vld [vmem:[%s5] sm:$0xff]
    %v78 = vlaneseq
    %v79 = vand.u32 %v78, 127
    %v80 = vld [vmem:[%s7] sm:$0xff]
    %v81 = vld [vmem:[%s7 + $0x8] sm:$0xff]
    %v82 = vld [vmem:[%s7 + $0x10] sm:$0xff]
    %v83 = vld [vmem:[%s7 + $0x18] sm:$0xff]
    %vm84 = vcmask 261120
    %v86 = vsel %vm84, %v75, 0
    %88 = vmatprep.subr.mxu0 0.0
    %89 = vmatpush1.msra.mxu0 %v80
    %90 = vmatprep.subr.mxu0 0.0
    %91 = vmatpush1.msra.mxu0 %v81
    %92 = vmatprep.subr.mxu0 0.0
    %93 = vmatpush1.msra.mxu0 %v82
    %94 = vmatprep.subr.mxu0 0.0
    %95 = vmatpush1.msra.mxu0 %v83
    %96 = vmatprep.subr.mxu0 0.0
    %97 = vmatpush1.msra.mxu0 0.0
    %98 = vmatprep.subr.mxu0 0.0
    %99 = vmatpush1.msra.mxu0 0.0
    %100 = vmatprep.subr.mxu0 0.0
    %101 = vmatpush1.msra.mxu0 0.0
    %102 = vmatprep.subr.mxu0 0.0
    %103 = vmatpush1.msra.mxu0 0.0
    %104 = vmatprep.subr.mxu0 0.0
    %105 = vmatpush1.msra.mxu0 0.0
    %106 = vmatprep.subr.mxu0 0.0
    %107 = vmatpush1.msra.mxu0 0.0
    %108 = vmatprep.subr.mxu0 0.0
    %109 = vmatpush1.msra.mxu0 0.0
    %110 = vmatprep.subr.mxu0 0.0
    %111 = vmatpush1.msra.mxu0 0.0
    %112 = vmatprep.subr.mxu0 0.0
    %113 = vmatpush1.msra.mxu0 0.0
    %114 = vmatprep.subr.mxu0 0.0
    %115 = vmatpush1.msra.mxu0 0.0
    %116 = vmatprep.subr.mxu0 0.0
    %117 = vmatpush1.msra.mxu0 0.0
    %118 = vmatprep.subr.mxu0 0.0
    %119 = vmatpush1.msra.mxu0 0.0
    %120 = vmatprep.subr.mxu0 0.0
    %121 = vmatpush1.msra.mxu0 0.0
    %122 = vmatprep.subr.mxu0 0.0
    %123 = vmatpush1.msra.mxu0 0.0
    %124 = vmatprep.subr.mxu0 0.0
    %125 = vmatpush1.msra.mxu0 0.0
    %126 = vmatprep.subr.mxu0 0.0
    %127 = vmatpush1.msra.mxu0 0.0
    %128 = vmatprep.subr.mxu0 0.0
    %129 = vmatpush1.msra.mxu0 0.0
    %130 = vmatprep.subr.mxu0 0.0
    %131 = vmatpush1.msra.mxu0 0.0
    %132 = vmatprep.subr.mxu0 0.0
    %133 = vmatpush1.msra.mxu0 0.0
    %134 = vmatprep.subr.mxu0 0.0
    %135 = vmatpush1.msra.mxu0 0.0
    %136 = vmatprep.subr.mxu0 0.0
    %137 = vmatpush1.msra.mxu0 0.0
    %138 = vmatprep.subr.mxu0 0.0
    %139 = vmatpush1.msra.mxu0 0.0
    %140 = vmatprep.subr.mxu0 0.0
    %141 = vmatpush1.msra.mxu0 0.0
    %142 = vmatprep.subr.mxu0 0.0
    %143 = vmatpush1.msra.mxu0 0.0
    %144 = vmatprep.subr.mxu0 0.0
    %145 = vmatpush1.msra.mxu0 0.0
    %146 = vmatprep.subr.mxu0 0.0
    %147 = vmatpush1.msra.mxu0 0.0
    %148 = vmatprep.subr.mxu0 0.0
    %149 = vmatpush1.msra.mxu0 0.0
    %150 = vmatprep.subr.mxu0 0.0
    %151 = vmatpush1.msra.mxu0 0.0
    %152 = vmatprep.mubr.f32.mxu0 0.0
    %153 = vmatmul.mubr.f32.gmra.mrb[0].mxu0 %v86
    %v154 = vpop.f32.mrb[0].mxu0
    %v155 = vadd.f32 0.0, %v154
    %v156 = vpop.f32.mrb[0].mxu0
    %157 = vdwg.mxu0
    %v158 = vld [vmem:[%s2] sm:$0xff]
    %v159 = vld [vmem:[%s2 + $0x8] sm:$0xff]
    %v160 = vld [vmem:[%s2 + $0x10] sm:$0xff]
    %v161 = vld [vmem:[%s2 + $0x18] sm:$0xff]
    %v162 = vld [vmem:[%s2 + $0x20] sm:$0xff]
    %v163 = vld [vmem:[%s2 + $0x28] sm:$0xff]
    %v164 = vld [vmem:[%s2 + $0x30] sm:$0xff]
    %v165 = vld [vmem:[%s2 + $0x38] sm:$0xff]
    %v167 = vcombine.high %v155, %v155
    %v169 = vunpack.c.l.s4 1966171168
    %v170 = vunpack.c.0.s8 %v169
    %v171 = vlaneseq
    %v172 = vshrl.u32 %v171, 7
    %v173 = vsub.s32 %v170, %v172
    %v174 = vrot.slane %v155, %v173
    %v176 = vunpack.c.l.s4 1966171168
    %v177 = vunpack.c.0.s8 %v176
    %v178 = vlaneseq
    %v179 = vshrl.u32 %v178, 7
    %v180 = vsub.s32 %v177, %v179
    %v181 = vrot.slane %v167, %v180
    %v182 = vcombine.high %v174, %v174
    %v183 = vcombine.high %v181, %v181
    %v185 = vunpack.c.l.s4 1966171168
    %v186 = vunpack.c.0.s8 %v185
    %v187 = vlaneseq
    %v188 = vshrl.u32 %v187, 7
    %v189 = vsub.s32 %v186, %v188
    %v190 = vrot.slane %v174, %v189
    %v192 = vunpack.c.l.s4 1966171168
    %v193 = vunpack.c.0.s8 %v192
    %v194 = vlaneseq
    %v195 = vshrl.u32 %v194, 7
    %v196 = vsub.s32 %v193, %v195
    %v197 = vrot.slane %v181, %v196
    %v199 = vunpack.c.l.s4 1966171168
    %v200 = vunpack.c.0.s8 %v199
    %v201 = vlaneseq
    %v202 = vshrl.u32 %v201, 7
    %v203 = vsub.s32 %v200, %v202
    %v204 = vrot.slane %v182, %v203
    %v206 = vunpack.c.l.s4 1966171168
    %v207 = vunpack.c.0.s8 %v206
    %v208 = vlaneseq
    %v209 = vshrl.u32 %v208, 7
    %v210 = vsub.s32 %v207, %v209
    %v211 = vrot.slane %v183, %v210
    %v212 = vcombine.high %v190, %v190
    %v213 = vcombine.high %v197, %v197
    %v214 = vcombine.high %v204, %v204
    %v215 = vcombine.high %v211, %v211
    %v216 = vlaneseq
    %v217 = vshrl.u32 %v216, 7
    %v218 = vsub.s32 0, %v217
    %v219 = vrot.slane %v190, %v218
    %v220 = vlaneseq
    %v221 = vshrl.u32 %v220, 7
    %v222 = vsub.s32 0, %v221
    %v223 = vrot.slane %v204, %v222
    %v224 = vlaneseq
    %v225 = vshrl.u32 %v224, 7
    %v226 = vsub.s32 0, %v225
    %v227 = vrot.slane %v212, %v226
    %v228 = vlaneseq
    %v229 = vshrl.u32 %v228, 7
    %v230 = vsub.s32 0, %v229
    %v231 = vrot.slane %v214, %v230
    %v232 = vlaneseq
    %v233 = vshrl.u32 %v232, 7
    %v234 = vsub.s32 0, %v233
    %v235 = vrot.slane %v197, %v234
    %v236 = vlaneseq
    %v237 = vshrl.u32 %v236, 7
    %v238 = vsub.s32 0, %v237
    %v239 = vrot.slane %v211, %v238
    %v240 = vlaneseq
    %v241 = vshrl.u32 %v240, 7
    %v242 = vsub.s32 0, %v241
    %v243 = vrot.slane %v213, %v242
    %v244 = vlaneseq
    %v245 = vshrl.u32 %v244, 7
    %v246 = vsub.s32 0, %v245
    %v247 = vrot.slane %v215, %v246
    %v256 = vadd.f32 %v158, %v219
    %v257 = vadd.f32 %v159, %v223
    %v258 = vadd.f32 %v160, %v227
    %v259 = vadd.f32 %v161, %v231
    %v260 = vadd.f32 %v162, %v235
    %v261 = vadd.f32 %v163, %v239
    %v262 = vadd.f32 %v164, %v243
    %v263 = vadd.f32 %v165, %v247
    %v264 = vtanh.pop %v256
    %v265 = vtanh.pop %v257
    %v266 = vtanh.pop %v258
    %v267 = vtanh.pop %v259
    %v268 = vtanh.pop %v260
    %v269 = vtanh.pop %v261
    %v270 = vtanh.pop %v262
    %v271 = vtanh.pop %v263
    %v272 = vld [vmem:[%s8] sm:$0x1]
    %v274 = vlaneseq
    %v275 = vshrl.u32 %v274, 7
    %v276 = vsub.s32 0, %v275
    %v277 = vrot.slane %v272, %v276
    %v279 = vmul.f32 %v264, %v277
    %v280 = vmul.f32 %v265, %v277
    %v281 = vmul.f32 %v266, %v277
    %v282 = vmul.f32 %v267, %v277
    %v283 = vmul.f32 %v268, %v277
    %v284 = vmul.f32 %v269, %v277
    %v285 = vmul.f32 %v270, %v277
    %v286 = vmul.f32 %v271, %v277
    %v287 = vsel %vm84, %v279, 0.0
    %288 = vadd.xlane.f32.xlu0 %v287
    %v289 = vpop.xlane.xlu0 %288
    %v290 = vsel %vm84, %v280, 0.0
    %291 = vadd.xlane.f32.xlu0 %v290
    %v292 = vpop.xlane.xlu0 %291
    %v293 = vsel %vm84, %v281, 0.0
    %294 = vadd.xlane.f32.xlu0 %v293
    %v295 = vpop.xlane.xlu0 %294
    %v296 = vsel %vm84, %v282, 0.0
    %297 = vadd.xlane.f32.xlu0 %v296
    %v298 = vpop.xlane.xlu0 %297
    %v299 = vsel %vm84, %v283, 0.0
    %300 = vadd.xlane.f32.xlu0 %v299
    %v301 = vpop.xlane.xlu0 %300
    %v302 = vsel %vm84, %v284, 0.0
    %303 = vadd.xlane.f32.xlu0 %v302
    %v304 = vpop.xlane.xlu0 %303
    %v305 = vsel %vm84, %v285, 0.0
    %306 = vadd.xlane.f32.xlu0 %v305
    %v307 = vpop.xlane.xlu0 %306
    %v308 = vsel %vm84, %v286, 0.0
    %309 = vadd.xlane.f32.xlu0 %v308
    %v310 = vpop.xlane.xlu0 %309
    %v311 = vld [vmem:[%s3] sm:$0xff]
    %vm312 = vcmp.eq.f32.partialorder %v311, 0.0
    %v321 = vlaneseq
    %v322 = vshrl.u32 %v321, 7
    %v323 = vsub.s32 %v79, %v322
    %v324 = vrot.slane %v289, %v323
    %v325 = vlaneseq
    %v326 = vshrl.u32 %v325, 7
    %v327 = vsub.s32 %v79, %v326
    %v328 = vrot.slane %v292, %v327
    %v329 = vlaneseq
    %v330 = vshrl.u32 %v329, 7
    %v331 = vsub.s32 %v79, %v330
    %v332 = vrot.slane %v295, %v331
    %v333 = vlaneseq
    %v334 = vshrl.u32 %v333, 7
    %v335 = vsub.s32 %v79, %v334
    %v336 = vrot.slane %v298, %v335
    %v337 = vlaneseq
    %v338 = vshrl.u32 %v337, 7
    %v339 = vsub.s32 %v79, %v338
    %v340 = vrot.slane %v301, %v339
    %v341 = vlaneseq
    %v342 = vshrl.u32 %v341, 7
    %v343 = vsub.s32 %v79, %v342
    %v344 = vrot.slane %v304, %v343
    %v345 = vlaneseq
    %v346 = vshrl.u32 %v345, 7
    %v347 = vsub.s32 %v79, %v346
    %v348 = vrot.slane %v307, %v347
    %v349 = vlaneseq
    %v350 = vshrl.u32 %v349, 7
    %v351 = vsub.s32 %v79, %v350
    %v352 = vrot.slane %v310, %v351
    %vm353 = vcmask 1041409
    %v354 = vsel %vm353, %v328, %v324
    %vm355 = vcmask 1042434
    %v356 = vsel %vm355, %v332, %v354
    %vm357 = vcmask 1043459
    %v358 = vsel %vm357, %v336, %v356
    %vm359 = vcmask 1044484
    %v360 = vsel %vm359, %v340, %v358
    %vm361 = vcmask 1045509
    %v362 = vsel %vm361, %v344, %v360
    %vm363 = vcmask 1046534
    %v364 = vsel %vm363, %v348, %v362
    %vm365 = vcmask 1047559
    %v366 = vsel %vm365, %v352, %v364
    %v368 = vsel %vm312, -1000000.0, %v366
    %vm369 = vcmask 64512
    %v370 = vsel %vm369, %v368, -inf
    %371 = vmax.xlane.f32.xlu0 %v370
    %v372 = vpop.xlane.xlu0 %371
    %v373 = vsub.f32 %v368, %v372
    %v374 = vmul.f32 %v373, 1.442695
    %v375 = vpow.pop %v374
    %v376 = vsel %vm369, %v375, 0.0
    %377 = vadd.xlane.f32.xlu0 %v376
    %v378 = vpop.xlane.xlu0 %377
    %v379 = vrcp.pop %v378
    %v380 = vmul.f32 %v375, %v379
    %v381 = vlaneseq
    %v382 = vshrl.u32 %v381, 7
    %v383 = vsub.s32 0, %v382
    %v384 = vrot.slane %v380, %v383
    %386 = vbcast.lane.b32.xlu0 %v384, 256
    %v387 = vpop.permute.xlu0 %386
    %v388 = vlaneseq
    %v389 = vshrl.u32 %v388, 7
    %v390 = vsub.s32 1, %v389
    %v391 = vrot.slane %v380, %v390
    %393 = vbcast.lane.b32.xlu0 %v391, 256
    %v394 = vpop.permute.xlu0 %393
    %v395 = vlaneseq
    %v396 = vshrl.u32 %v395, 7
    %v397 = vsub.s32 2, %v396
    %v398 = vrot.slane %v380, %v397
    %400 = vbcast.lane.b32.xlu0 %v398, 256
    %v401 = vpop.permute.xlu0 %400
    %v402 = vlaneseq
    %v403 = vshrl.u32 %v402, 7
    %v404 = vsub.s32 3, %v403
    %v405 = vrot.slane %v380, %v404
    %407 = vbcast.lane.b32.xlu0 %v405, 256
    %v408 = vpop.permute.xlu0 %407
    %v409 = vlaneseq
    %v410 = vshrl.u32 %v409, 7
    %v411 = vsub.s32 4, %v410
    %v412 = vrot.slane %v380, %v411
    %414 = vbcast.lane.b32.xlu0 %v412, 256
    %v415 = vpop.permute.xlu0 %414
    %v416 = vlaneseq
    %v417 = vshrl.u32 %v416, 7
    %v418 = vsub.s32 5, %v417
    %v419 = vrot.slane %v380, %v418
    %421 = vbcast.lane.b32.xlu0 %v419, 256
    %v422 = vpop.permute.xlu0 %421
    %v423 = vlaneseq
    %v424 = vshrl.u32 %v423, 7
    %v425 = vsub.s32 6, %v424
    %v426 = vrot.slane %v380, %v425
    %428 = vbcast.lane.b32.xlu0 %v426, 256
    %v429 = vpop.permute.xlu0 %428
    %v430 = vlaneseq
    %v431 = vshrl.u32 %v430, 7
    %v432 = vsub.s32 7, %v431
    %v433 = vrot.slane %v380, %v432
    %435 = vbcast.lane.b32.xlu0 %v433, 256
    %v436 = vpop.permute.xlu0 %435
    %v437 = vld [vmem:[%s1] sm:$0xff]
    %v438 = vld [vmem:[%s1 + $0x8] sm:$0xff]
    %v439 = vld [vmem:[%s1 + $0x10] sm:$0xff]
    %v440 = vld [vmem:[%s1 + $0x18] sm:$0xff]
    %v441 = vld [vmem:[%s1 + $0x20] sm:$0xff]
    %v442 = vld [vmem:[%s1 + $0x28] sm:$0xff]
    %v443 = vld [vmem:[%s1 + $0x30] sm:$0xff]
    %v444 = vld [vmem:[%s1 + $0x38] sm:$0xff]
    %v445 = vmul.f32 %v387, %v437
    %v446 = vmul.f32 %v394, %v438
    %v447 = vmul.f32 %v401, %v439
    %v448 = vmul.f32 %v408, %v440
    %v449 = vmul.f32 %v415, %v441
    %v450 = vmul.f32 %v422, %v442
    %v451 = vmul.f32 %v429, %v443
    %v452 = vmul.f32 %v436, %v444
    %v453 = vsel %vm84, %v445, 0.0
    %v454 = vrot.slane %v453, 4
    %v455 = vadd.f32 %v453, %v454
    %v456 = vrot.slane %v455, 2
    %v457 = vadd.f32 %v455, %v456
    %v458 = vrot.slane %v457, 1
    %v459 = vadd.f32 %v457, %v458
    %v460 = vsel %vm84, %v446, 0.0
    %v461 = vrot.slane %v460, 4
    %v462 = vadd.f32 %v460, %v461
    %v463 = vrot.slane %v462, 2
    %v464 = vadd.f32 %v462, %v463
    %v465 = vrot.slane %v464, 1
    %v466 = vadd.f32 %v464, %v465
    %v467 = vsel %vm84, %v447, 0.0
    %v468 = vrot.slane %v467, 4
    %v469 = vadd.f32 %v467, %v468
    %v470 = vrot.slane %v469, 2
    %v471 = vadd.f32 %v469, %v470
    %v472 = vrot.slane %v471, 1
    %v473 = vadd.f32 %v471, %v472
    %v474 = vsel %vm84, %v448, 0.0
    %v475 = vrot.slane %v474, 4
    %v476 = vadd.f32 %v474, %v475
    %v477 = vrot.slane %v476, 2
    %v478 = vadd.f32 %v476, %v477
    %v479 = vrot.slane %v478, 1
    %v480 = vadd.f32 %v478, %v479
    %v481 = vsel %vm84, %v449, 0.0
    %v482 = vrot.slane %v481, 4
    %v483 = vadd.f32 %v481, %v482
    %v484 = vrot.slane %v483, 2
    %v485 = vadd.f32 %v483, %v484
    %v486 = vrot.slane %v485, 1
    %v487 = vadd.f32 %v485, %v486
    %v488 = vsel %vm84, %v450, 0.0
    %v489 = vrot.slane %v488, 4
    %v490 = vadd.f32 %v488, %v489
    %v491 = vrot.slane %v490, 2
    %v492 = vadd.f32 %v490, %v491
    %v493 = vrot.slane %v492, 1
    %v494 = vadd.f32 %v492, %v493
    %v495 = vsel %vm84, %v451, 0.0
    %v496 = vrot.slane %v495, 4
    %v497 = vadd.f32 %v495, %v496
    %v498 = vrot.slane %v497, 2
    %v499 = vadd.f32 %v497, %v498
    %v500 = vrot.slane %v499, 1
    %v501 = vadd.f32 %v499, %v500
    %v502 = vsel %vm84, %v452, 0.0
    %v503 = vrot.slane %v502, 4
    %v504 = vadd.f32 %v502, %v503
    %v505 = vrot.slane %v504, 2
    %v506 = vadd.f32 %v504, %v505
    %v507 = vrot.slane %v506, 1
    %v508 = vadd.f32 %v506, %v507
    %v509 = vld [vmem:[%s9] sm:$0xff]
    %v510 = vld [vmem:[%s9 + $0x8] sm:$0xff]
    %v511 = vld [vmem:[%s9 + $0x10] sm:$0xff]
    %v512 = vld [vmem:[%s9 + $0x18] sm:$0xff]
    %v513 = vld [vmem:[%s10] sm:$0xff]
    %v514 = vld [vmem:[%s10 + $0x8] sm:$0xff]
    %v515 = vld [vmem:[%s10 + $0x10] sm:$0xff]
    %v516 = vld [vmem:[%s10 + $0x18] sm:$0xff]
    %517 = vmatprep.subr.mxu0 0.0
    %518 = vmatpush1.msra.mxu0 %v513
    %519 = vmatprep.subr.mxu0 0.0
    %520 = vmatpush1.msra.mxu0 %v514
    %521 = vmatprep.subr.mxu0 0.0
    %522 = vmatpush1.msra.mxu0 %v515
    %523 = vmatprep.subr.mxu0 0.0
    %524 = vmatpush1.msra.mxu0 %v516
    %525 = vmatprep.subr.mxu0 0.0
    %526 = vmatpush1.msra.mxu0 0.0
    %527 = vmatprep.subr.mxu0 0.0
    %528 = vmatpush1.msra.mxu0 0.0
    %529 = vmatprep.subr.mxu0 0.0
    %530 = vmatpush1.msra.mxu0 0.0
    %531 = vmatprep.subr.mxu0 0.0
    %532 = vmatpush1.msra.mxu0 0.0
    %533 = vmatprep.subr.mxu0 0.0
    %534 = vmatpush1.msra.mxu0 0.0
    %535 = vmatprep.subr.mxu0 0.0
    %536 = vmatpush1.msra.mxu0 0.0
    %537 = vmatprep.subr.mxu0 0.0
    %538 = vmatpush1.msra.mxu0 0.0
    %539 = vmatprep.subr.mxu0 0.0
    %540 = vmatpush1.msra.mxu0 0.0
    %541 = vmatprep.subr.mxu0 0.0
    %542 = vmatpush1.msra.mxu0 0.0
    %543 = vmatprep.subr.mxu0 0.0
    %544 = vmatpush1.msra.mxu0 0.0
    %545 = vmatprep.subr.mxu0 0.0
    %546 = vmatpush1.msra.mxu0 0.0
    %547 = vmatprep.subr.mxu0 0.0
    %548 = vmatpush1.msra.mxu0 0.0
    %549 = vmatprep.subr.mxu0 0.0
    %550 = vmatpush1.msra.mxu0 0.0
    %551 = vmatprep.subr.mxu0 0.0
    %552 = vmatpush1.msra.mxu0 0.0
    %553 = vmatprep.subr.mxu0 0.0
    %554 = vmatpush1.msra.mxu0 0.0
    %555 = vmatprep.subr.mxu0 0.0
    %556 = vmatpush1.msra.mxu0 0.0
    %557 = vmatprep.subr.mxu0 0.0
    %558 = vmatpush1.msra.mxu0 0.0
    %559 = vmatprep.subr.mxu0 0.0
    %560 = vmatpush1.msra.mxu0 0.0
    %561 = vmatprep.subr.mxu0 0.0
    %562 = vmatpush1.msra.mxu0 0.0
    %563 = vmatprep.subr.mxu0 0.0
    %564 = vmatpush1.msra.mxu0 0.0
    %565 = vmatprep.subr.mxu0 0.0
    %566 = vmatpush1.msra.mxu0 0.0
    %567 = vmatprep.subr.mxu0 0.0
    %568 = vmatpush1.msra.mxu0 0.0
    %569 = vmatprep.subr.mxu0 0.0
    %570 = vmatpush1.msra.mxu0 0.0
    %571 = vmatprep.subr.mxu0 0.0
    %572 = vmatpush1.msra.mxu0 0.0
    %573 = vmatprep.subr.mxu0 0.0
    %574 = vmatpush1.msra.mxu0 0.0
    %575 = vmatprep.subr.mxu0 0.0
    %576 = vmatpush1.msra.mxu0 0.0
    %577 = vmatprep.subr.mxu0 0.0
    %578 = vmatpush1.msra.mxu0 0.0
    %579 = vmatprep.subr.mxu0 0.0
    %580 = vmatpush1.msra.mxu0 0.0
    %581 = vmatprep.mubr.f32.mxu0 0.0
    %582 = vmatmul.mubr.f32.gmra.mrb[0].mxu0 %v86
    %v583 = vpop.f32.mrb[0].mxu0
    %v584 = vadd.f32 0.0, %v583
    %v585 = vpop.f32.mrb[0].mxu0
    %586 = vdwg.mxu0
    %v595 = vsel %vm353, %v466, %v459
    %v596 = vsel %vm355, %v473, %v595
    %v597 = vsel %vm357, %v480, %v596
    %v598 = vsel %vm359, %v487, %v597
    %v599 = vsel %vm361, %v494, %v598
    %v600 = vsel %vm363, %v501, %v599
    %v601 = vsel %vm365, %v508, %v600
    %v602 = vsel %vm84, %v601, 0
    %604 = vmatprep.subr.mxu0 0.0
    %605 = vmatpush1.msra.mxu0 %v509
    %606 = vmatprep.subr.mxu0 0.0
    %607 = vmatpush1.msra.mxu0 %v510
    %608 = vmatprep.subr.mxu0 0.0
    %609 = vmatpush1.msra.mxu0 %v511
    %610 = vmatprep.subr.mxu0 0.0
    %611 = vmatpush1.msra.mxu0 %v512
    %612 = vmatprep.subr.mxu0 0.0
    %613 = vmatpush1.msra.mxu0 0.0
    %614 = vmatprep.subr.mxu0 0.0
    %615 = vmatpush1.msra.mxu0 0.0
    %616 = vmatprep.subr.mxu0 0.0
    %617 = vmatpush1.msra.mxu0 0.0
    %618 = vmatprep.subr.mxu0 0.0
    %619 = vmatpush1.msra.mxu0 0.0
    %620 = vmatprep.subr.mxu0 0.0
    %621 = vmatpush1.msra.mxu0 0.0
    %622 = vmatprep.subr.mxu0 0.0
    %623 = vmatpush1.msra.mxu0 0.0
    %624 = vmatprep.subr.mxu0 0.0
    %625 = vmatpush1.msra.mxu0 0.0
    %626 = vmatprep.subr.mxu0 0.0
    %627 = vmatpush1.msra.mxu0 0.0
    %628 = vmatprep.subr.mxu0 0.0
    %629 = vmatpush1.msra.mxu0 0.0
    %630 = vmatprep.subr.mxu0 0.0
    %631 = vmatpush1.msra.mxu0 0.0
    %632 = vmatprep.subr.mxu0 0.0
    %633 = vmatpush1.msra.mxu0 0.0
    %634 = vmatprep.subr.mxu0 0.0
    %635 = vmatpush1.msra.mxu0 0.0
    %636 = vmatprep.subr.mxu0 0.0
    %637 = vmatpush1.msra.mxu0 0.0
    %638 = vmatprep.subr.mxu0 0.0
    %639 = vmatpush1.msra.mxu0 0.0
    %640 = vmatprep.subr.mxu0 0.0
    %641 = vmatpush1.msra.mxu0 0.0
    %642 = vmatprep.subr.mxu0 0.0
    %643 = vmatpush1.msra.mxu0 0.0
    %644 = vmatprep.subr.mxu0 0.0
    %645 = vmatpush1.msra.mxu0 0.0
    %646 = vmatprep.subr.mxu0 0.0
    %647 = vmatpush1.msra.mxu0 0.0
    %648 = vmatprep.subr.mxu0 0.0
    %649 = vmatpush1.msra.mxu0 0.0
    %650 = vmatprep.subr.mxu0 0.0
    %651 = vmatpush1.msra.mxu0 0.0
    %652 = vmatprep.subr.mxu0 0.0
    %653 = vmatpush1.msra.mxu0 0.0
    %654 = vmatprep.subr.mxu0 0.0
    %655 = vmatpush1.msra.mxu0 0.0
    %656 = vmatprep.subr.mxu0 0.0
    %657 = vmatpush1.msra.mxu0 0.0
    %658 = vmatprep.subr.mxu0 0.0
    %659 = vmatpush1.msra.mxu0 0.0
    %660 = vmatprep.subr.mxu0 0.0
    %661 = vmatpush1.msra.mxu0 0.0
    %662 = vmatprep.subr.mxu0 0.0
    %663 = vmatpush1.msra.mxu0 0.0
    %664 = vmatprep.subr.mxu0 0.0
    %665 = vmatpush1.msra.mxu0 0.0
    %666 = vmatprep.subr.mxu0 0.0
    %667 = vmatpush1.msra.mxu0 0.0
    %668 = vmatprep.mubr.f32.mxu0 0.0
    %669 = vmatmul.mubr.f32.gmra.mrb[0].mxu0 %v602
    %v670 = vpop.f32.mrb[0].mxu0
    %v671 = vadd.f32 %v584, %v670
    %v672 = vpop.f32.mrb[0].mxu0
    %673 = vdwg.mxu0
    %v674 = vld [vmem:[%s11] sm:$0xff]
    %v675 = vld [vmem:[%s11 + $0x8] sm:$0xff]
    %v676 = vld [vmem:[%s11 + $0x10] sm:$0xff]
    %v677 = vld [vmem:[%s11 + $0x18] sm:$0xff]
    %v678 = vld [vmem:[%s11 + $0x20] sm:$0xff]
    %v679 = vld [vmem:[%s11 + $0x28] sm:$0xff]
    %v680 = vld [vmem:[%s11 + $0x30] sm:$0xff]
    %v681 = vld [vmem:[%s11 + $0x38] sm:$0xff]
    %v682 = vld [vmem:[%s11 + $0x40] sm:$0xff]
    %v683 = vld [vmem:[%s11 + $0x48] sm:$0xff]
    %v684 = vld [vmem:[%s11 + $0x50] sm:$0xff]
    %v685 = vld [vmem:[%s11 + $0x58] sm:$0xff]
    %v686 = vld [vmem:[%s11 + $0x60] sm:$0xff]
    %v687 = vld [vmem:[%s11 + $0x68] sm:$0xff]
    %v688 = vld [vmem:[%s11 + $0x70] sm:$0xff]
    %v689 = vld [vmem:[%s11 + $0x78] sm:$0xff]
    %690 = vmatprep.subr.mxu0 0.0
    %691 = vmatpush1.msra.mxu0 %v674
    %692 = vmatprep.subr.mxu0 0.0
    %693 = vmatpush1.msra.mxu0 %v675
    %694 = vmatprep.subr.mxu0 0.0
    %695 = vmatpush1.msra.mxu0 %v676
    %696 = vmatprep.subr.mxu0 0.0
    %697 = vmatpush1.msra.mxu0 %v677
    %698 = vmatprep.subr.mxu0 0.0
    %699 = vmatpush1.msra.mxu0 %v678
    %700 = vmatprep.subr.mxu0 0.0
    %701 = vmatpush1.msra.mxu0 %v679
    %702 = vmatprep.subr.mxu0 0.0
    %703 = vmatpush1.msra.mxu0 %v680
    %704 = vmatprep.subr.mxu0 0.0
    %705 = vmatpush1.msra.mxu0 %v681
    %706 = vmatprep.subr.mxu0 0.0
    %707 = vmatpush1.msra.mxu0 %v682
    %708 = vmatprep.subr.mxu0 0.0
    %709 = vmatpush1.msra.mxu0 %v683
    %710 = vmatprep.subr.mxu0 0.0
    %711 = vmatpush1.msra.mxu0 %v684
    %712 = vmatprep.subr.mxu0 0.0
    %713 = vmatpush1.msra.mxu0 %v685
    %714 = vmatprep.subr.mxu0 0.0
    %715 = vmatpush1.msra.mxu0 %v686
    %716 = vmatprep.subr.mxu0 0.0
    %717 = vmatpush1.msra.mxu0 %v687
    %718 = vmatprep.subr.mxu0 0.0
    %719 = vmatpush1.msra.mxu0 %v688
    %720 = vmatprep.subr.mxu0 0.0
    %721 = vmatpush1.msra.mxu0 %v689
    %722 = vmatprep.subr.mxu0 0.0
    %723 = vmatpush1.msra.mxu0 0.0
    %724 = vmatprep.subr.mxu0 0.0
    %725 = vmatpush1.msra.mxu0 0.0
    %726 = vmatprep.subr.mxu0 0.0
    %727 = vmatpush1.msra.mxu0 0.0
    %728 = vmatprep.subr.mxu0 0.0
    %729 = vmatpush1.msra.mxu0 0.0
    %730 = vmatprep.subr.mxu0 0.0
    %731 = vmatpush1.msra.mxu0 0.0
    %732 = vmatprep.subr.mxu0 0.0
    %733 = vmatpush1.msra.mxu0 0.0
    %734 = vmatprep.subr.mxu0 0.0
    %735 = vmatpush1.msra.mxu0 0.0
    %736 = vmatprep.subr.mxu0 0.0
    %737 = vmatpush1.msra.mxu0 0.0
    %738 = vmatprep.subr.mxu0 0.0
    %739 = vmatpush1.msra.mxu0 0.0
    %740 = vmatprep.subr.mxu0 0.0
    %741 = vmatpush1.msra.mxu0 0.0
    %742 = vmatprep.subr.mxu0 0.0
    %743 = vmatpush1.msra.mxu0 0.0
    %744 = vmatprep.subr.mxu0 0.0
    %745 = vmatpush1.msra.mxu0 0.0
    %746 = vmatprep.subr.mxu0 0.0
    %747 = vmatpush1.msra.mxu0 0.0
    %748 = vmatprep.subr.mxu0 0.0
    %749 = vmatpush1.msra.mxu0 0.0
    %750 = vmatprep.subr.mxu0 0.0
    %751 = vmatpush1.msra.mxu0 0.0
    %752 = vmatprep.subr.mxu0 0.0
    %753 = vmatpush1.msra.mxu0 0.0
    %754 = vmatprep.mubr.f32.mxu0 0.0
    %755 = vmatmul.mubr.f32.gmra.mrb[0].mxu0 %v76
    %v756 = vpop.f32.mrb[0].mxu0
    %v757 = vadd.f32 0.0, %v756
    %v758 = vpop.f32.mrb[0].mxu0
    %759 = vdwg.mxu0
    %v760 = vadd.f32 %v671, %v757
    %v761 = vld [vmem:[%s12] sm:$0x1]
    %v763 = vlaneseq
    %v764 = vshrl.u32 %v763, 7
    %v765 = vsub.s32 0, %v764
    %v766 = vrot.slane %v761, %v765
    %v768 = vadd.f32 %v760, %v766
    %v769 = vxor.u32 %v768, 2147483648
    %v770 = vmul.f32 %v769, 1.442695
    %v771 = vpow.pop %v770
    %v772 = vadd.f32 %v771, 1.0
    %v773 = vrcp.pop %v772
    %v774 = vmul.f32 1.0, %v773
    %776 = vrot.lane.b32.xlu0 %v768, 32
    %v777 = vpop.permute.xlu0 %776
    %v779 = vmul.f32 %v774, %v777
    %781 = vrot.lane.b32.xlu0 %v779, 64
    %v782 = vpop.permute.xlu0 %781
    %v784 = vadd.f32 %v768, %v782
    %v785 = vtanh.pop %v784
    %v786 = vsub.f32 1.0, %v774
    %788 = vrot.lane.b32.xlu0 %v785, 96
    %v789 = vpop.permute.xlu0 %788
    %v791 = vmul.f32 %v786, %v789
    %792 = vrot.lane.b32.xlu0 %v75, 32
    %v793 = vpop.permute.xlu0 %792
    %v795 = vmul.f32 %v774, %v793
    %v796 = vadd.f32 %v791, %v795
    %v797 = vld [vmem:[%s13] sm:$0xff]
    %v798 = vld [vmem:[%s13 + $0x8] sm:$0xff]
    %v799 = vld [vmem:[%s13 + $0x10] sm:$0xff]
    %v800 = vld [vmem:[%s13 + $0x18] sm:$0xff]
    %v801 = vld [vmem:[%s14] sm:$0x1]
    %v803 = vlaneseq
    %v804 = vshrl.u32 %v803, 7
    %v805 = vsub.s32 0, %v804
    %v806 = vrot.slane %v801, %v805
    %809 = vrot.lane.b32.xlu0 %v796, 96
    %v810 = vpop.permute.xlu0 %809
    %v811 = vsel %vm84, %v810, 0
    %813 = vmatprep.subr.mxu0 0.0
    %814 = vmatpush1.msra.mxu0 %v797
    %815 = vmatprep.subr.mxu0 0.0
    %816 = vmatpush1.msra.mxu0 %v798
    %817 = vmatprep.subr.mxu0 0.0
    %818 = vmatpush1.msra.mxu0 %v799
    %819 = vmatprep.subr.mxu0 0.0
    %820 = vmatpush1.msra.mxu0 %v800
    %821 = vmatprep.subr.mxu0 0.0
    %822 = vmatpush1.msra.mxu0 0.0
    %823 = vmatprep.subr.mxu0 0.0
    %824 = vmatpush1.msra.mxu0 0.0
    %825 = vmatprep.subr.mxu0 0.0
    %826 = vmatpush1.msra.mxu0 0.0
    %827 = vmatprep.subr.mxu0 0.0
    %828 = vmatpush1.msra.mxu0 0.0
    %829 = vmatprep.subr.mxu0 0.0
    %830 = vmatpush1.msra.mxu0 0.0
    %831 = vmatprep.subr.mxu0 0.0
    %832 = vmatpush1.msra.mxu0 0.0
    %833 = vmatprep.subr.mxu0 0.0
    %834 = vmatpush1.msra.mxu0 0.0
    %835 = vmatprep.subr.mxu0 0.0
    %836 = vmatpush1.msra.mxu0 0.0
    %837 = vmatprep.subr.mxu0 0.0
    %838 = vmatpush1.msra.mxu0 0.0
    %839 = vmatprep.subr.mxu0 0.0
    %840 = vmatpush1.msra.mxu0 0.0
    %841 = vmatprep.subr.mxu0 0.0
    %842 = vmatpush1.msra.mxu0 0.0
    %843 = vmatprep.subr.mxu0 0.0
    %844 = vmatpush1.msra.mxu0 0.0
    %845 = vmatprep.subr.mxu0 0.0
    %846 = vmatpush1.msra.mxu0 0.0
    %847 = vmatprep.subr.mxu0 0.0
    %848 = vmatpush1.msra.mxu0 0.0
    %849 = vmatprep.subr.mxu0 0.0
    %850 = vmatpush1.msra.mxu0 0.0
    %851 = vmatprep.subr.mxu0 0.0
    %852 = vmatpush1.msra.mxu0 0.0
    %853 = vmatprep.subr.mxu0 0.0
    %854 = vmatpush1.msra.mxu0 0.0
    %855 = vmatprep.subr.mxu0 0.0
    %856 = vmatpush1.msra.mxu0 0.0
    %857 = vmatprep.subr.mxu0 0.0
    %858 = vmatpush1.msra.mxu0 0.0
    %859 = vmatprep.subr.mxu0 0.0
    %860 = vmatpush1.msra.mxu0 0.0
    %861 = vmatprep.subr.mxu0 0.0
    %862 = vmatpush1.msra.mxu0 0.0
    %863 = vmatprep.subr.mxu0 0.0
    %864 = vmatpush1.msra.mxu0 0.0
    %865 = vmatprep.subr.mxu0 0.0
    %866 = vmatpush1.msra.mxu0 0.0
    %867 = vmatprep.subr.mxu0 0.0
    %868 = vmatpush1.msra.mxu0 0.0
    %869 = vmatprep.subr.mxu0 0.0
    %870 = vmatpush1.msra.mxu0 0.0
    %871 = vmatprep.subr.mxu0 0.0
    %872 = vmatpush1.msra.mxu0 0.0
    %873 = vmatprep.subr.mxu0 0.0
    %874 = vmatpush1.msra.mxu0 0.0
    %875 = vmatprep.subr.mxu0 0.0
    %876 = vmatpush1.msra.mxu0 0.0
    %877 = vmatprep.mubr.f32.mxu0 0.0
    %878 = vmatmul.mubr.f32.gmra.mrb[0].mxu0 %v811
    %v879 = vpop.f32.mrb[0].mxu0
    %v880 = vadd.f32 %v806, %v879
    %v881 = vpop.f32.mrb[0].mxu0
    %882 = vdwg.mxu0
    %883 = vmax.xlane.f32.xlu0 %v880
    %v884 = vpop.xlane.xlu0 %883
    %v885 = vsub.f32 %v880, %v884
    %v886 = vmul.f32 %v885, 1.442695
    %v887 = vpow.pop %v886
    %v888 = vmul.f32 %v887, %v77
    %889 = vadd.xlane.f32.xlu0 %v888
    %v890 = vpop.xlane.xlu0 %889
    %v891 = vadd.f32 %v890, 1e-06
    %v892 = vlog2.pop %v891
    %v893 = vmul.f32 %v892, 0.6931472
    %vm894 = vcmp.ne.f32.partialorder %v77, 0.0
    %v895 = vsub.f32 %v885, %v893
    %v896 = vmax.f32 %v895, -13.815511
    %v897 = vmin.f32 %v896, 0.0
    %v898 = vsel %vm894, %v897, -13.815511
    %899 = vmax.xlane.f32.xlu0 %v898
    %v900 = vpop.xlane.xlu0 %899
    %vm901 = vcmp.eq.f32.partialorder %v898, %v900
    %v902 = vsel %vm901, %v79, 128
    %v903 = vand.u32 %v902, 65535
    %v904 = vshra.s32 %v902, 16
    %v905 = vcvt.s32.f32 %v903
    %v906 = vcvt.s32.f32 %v904
    %907 = vmin.xlane.f32.xlu0 %v906
    %v908 = vpop.xlane.xlu0 %907
    %vm909 = vcmp.eq.f32.partialorder %v906, %v908
    %v910 = vsel %vm909, %v905, inf
    %911 = vmin.xlane.f32.xlu0 %v910
    %v912 = vpop.xlane.xlu0 %911
    %v913 = vcvt.f32.s32 %v912
    %v914 = vcvt.f32.s32 %v908
    %v915 = vshll.u32 %v914, 16
    %v916 = vadd.s32 %v915, %v913
    %vm917 = vcmp.eq.s32.totalorder %v79, %v916
    %v918 = vsel %vm917, 1, 0
    %v919 = vcvt.s32.f32 %v918
    %v920 = vld [vmem:[%s6] sm:$0xff]
    %v921 = vld [vmem:[%s6 + $0x8] sm:$0xff]
    %v922 = vld [vmem:[%s6 + $0x10] sm:$0xff]
    %v923 = vld [vmem:[%s6 + $0x18] sm:$0xff]
    %v924 = vld [vmem:[%s6 + $0x20] sm:$0xff]
    %v925 = vld [vmem:[%s6 + $0x28] sm:$0xff]
    %v926 = vld [vmem:[%s6 + $0x30] sm:$0xff]
    %v927 = vld [vmem:[%s6 + $0x38] sm:$0xff]
    %v928 = vld [vmem:[%s6 + $0x40] sm:$0xff]
    %v929 = vld [vmem:[%s6 + $0x48] sm:$0xff]
    %v930 = vld [vmem:[%s6 + $0x50] sm:$0xff]
    %v931 = vld [vmem:[%s6 + $0x58] sm:$0xff]
    %v932 = vld [vmem:[%s6 + $0x60] sm:$0xff]
    %v933 = vld [vmem:[%s6 + $0x68] sm:$0xff]
    %v934 = vld [vmem:[%s6 + $0x70] sm:$0xff]
    %v935 = vld [vmem:[%s6 + $0x78] sm:$0xff]
    %936 = vmatprep.subr.mxu0 0.0
    %937 = vmatpush1.msra.mxu0 %v920
    %938 = vmatprep.subr.mxu0 0.0
    %939 = vmatpush1.msra.mxu0 %v921
    %940 = vmatprep.subr.mxu0 0.0
    %941 = vmatpush1.msra.mxu0 %v922
    %942 = vmatprep.subr.mxu0 0.0
    %943 = vmatpush1.msra.mxu0 %v923
    %944 = vmatprep.subr.mxu0 0.0
    %945 = vmatpush1.msra.mxu0 %v924
    %946 = vmatprep.subr.mxu0 0.0
    %947 = vmatpush1.msra.mxu0 %v925
    %948 = vmatprep.subr.mxu0 0.0
    %949 = vmatpush1.msra.mxu0 %v926
    %950 = vmatprep.subr.mxu0 0.0
    %951 = vmatpush1.msra.mxu0 %v927
    %952 = vmatprep.subr.mxu0 0.0
    %953 = vmatpush1.msra.mxu0 %v928
    %954 = vmatprep.subr.mxu0 0.0
    %955 = vmatpush1.msra.mxu0 %v929
    %956 = vmatprep.subr.mxu0 0.0
    %957 = vmatpush1.msra.mxu0 %v930
    %958 = vmatprep.subr.mxu0 0.0
    %959 = vmatpush1.msra.mxu0 %v931
    %960 = vmatprep.subr.mxu0 0.0
    %961 = vmatpush1.msra.mxu0 %v932
    %962 = vmatprep.subr.mxu0 0.0
    %963 = vmatpush1.msra.mxu0 %v933
    %964 = vmatprep.subr.mxu0 0.0
    %965 = vmatpush1.msra.mxu0 %v934
    %966 = vmatprep.subr.mxu0 0.0
    %967 = vmatpush1.msra.mxu0 %v935
    %968 = vmatprep.subr.mxu0 0.0
    %969 = vmatpush1.msra.mxu0 0.0
    %970 = vmatprep.subr.mxu0 0.0
    %971 = vmatpush1.msra.mxu0 0.0
    %972 = vmatprep.subr.mxu0 0.0
    %973 = vmatpush1.msra.mxu0 0.0
    %974 = vmatprep.subr.mxu0 0.0
    %975 = vmatpush1.msra.mxu0 0.0
    %976 = vmatprep.subr.mxu0 0.0
    %977 = vmatpush1.msra.mxu0 0.0
    %978 = vmatprep.subr.mxu0 0.0
    %979 = vmatpush1.msra.mxu0 0.0
    %980 = vmatprep.subr.mxu0 0.0
    %981 = vmatpush1.msra.mxu0 0.0
    %982 = vmatprep.subr.mxu0 0.0
    %983 = vmatpush1.msra.mxu0 0.0
    %984 = vmatprep.subr.mxu0 0.0
    %985 = vmatpush1.msra.mxu0 0.0
    %986 = vmatprep.subr.mxu0 0.0
    %987 = vmatpush1.msra.mxu0 0.0
    %988 = vmatprep.subr.mxu0 0.0
    %989 = vmatpush1.msra.mxu0 0.0
    %990 = vmatprep.subr.mxu0 0.0
    %991 = vmatpush1.msra.mxu0 0.0
    %992 = vmatprep.subr.mxu0 0.0
    %993 = vmatpush1.msra.mxu0 0.0
    %994 = vmatprep.subr.mxu0 0.0
    %995 = vmatpush1.msra.mxu0 0.0
    %996 = vmatprep.subr.mxu0 0.0
    %997 = vmatpush1.msra.mxu0 0.0
    %998 = vmatprep.subr.mxu0 0.0
    %999 = vmatpush1.msra.mxu0 0.0
    %1000 = vmatprep.mubr.f32.mxu0 0.0
    %1001 = vmatmul.mubr.f32.gmra.mrb[0].mxu0 %v919
    %v1002 = vpop.f32.mrb[0].mxu0
    %v1003 = vadd.f32 0.0, %v1002
    %v1004 = vpop.f32.mrb[0].mxu0
    %1005 = vdwg.mxu0
    %v1006 = vld [vmem:[%s15] sm:$0xff]
    %v1007 = vld [vmem:[%s15 + $0x8] sm:$0xff]
    %v1008 = vld [vmem:[%s15 + $0x10] sm:$0xff]
    %v1009 = vld [vmem:[%s15 + $0x18] sm:$0xff]
    %v1010 = vld [vmem:[%s16] sm:$0xff]
    %v1011 = vld [vmem:[%s16 + $0x8] sm:$0xff]
    %v1012 = vld [vmem:[%s16 + $0x10] sm:$0xff]
    %v1013 = vld [vmem:[%s16 + $0x18] sm:$0xff]
    %1014 = vmatprep.subr.mxu0 0.0
    %1015 = vmatpush1.msra.mxu0 %v1010
    %1016 = vmatprep.subr.mxu0 0.0
    %1017 = vmatpush1.msra.mxu0 %v1011
    %1018 = vmatprep.subr.mxu0 0.0
    %1019 = vmatpush1.msra.mxu0 %v1012
    %1020 = vmatprep.subr.mxu0 0.0
    %1021 = vmatpush1.msra.mxu0 %v1013
    %1022 = vmatprep.subr.mxu0 0.0
    %1023 = vmatpush1.msra.mxu0 0.0
    %1024 = vmatprep.subr.mxu0 0.0
    %1025 = vmatpush1.msra.mxu0 0.0
    %1026 = vmatprep.subr.mxu0 0.0
    %1027 = vmatpush1.msra.mxu0 0.0
    %1028 = vmatprep.subr.mxu0 0.0
    %1029 = vmatpush1.msra.mxu0 0.0
    %1030 = vmatprep.subr.mxu0 0.0
    %1031 = vmatpush1.msra.mxu0 0.0
    %1032 = vmatprep.subr.mxu0 0.0
    %1033 = vmatpush1.msra.mxu0 0.0
    %1034 = vmatprep.subr.mxu0 0.0
    %1035 = vmatpush1.msra.mxu0 0.0
    %1036 = vmatprep.subr.mxu0 0.0
    %1037 = vmatpush1.msra.mxu0 0.0
    %1038 = vmatprep.subr.mxu0 0.0
    %1039 = vmatpush1.msra.mxu0 0.0
    %1040 = vmatprep.subr.mxu0 0.0
    %1041 = vmatpush1.msra.mxu0 0.0
    %1042 = vmatprep.subr.mxu0 0.0
    %1043 = vmatpush1.msra.mxu0 0.0
    %1044 = vmatprep.subr.mxu0 0.0
    %1045 = vmatpush1.msra.mxu0 0.0
    %1046 = vmatprep.subr.mxu0 0.0
    %1047 = vmatpush1.msra.mxu0 0.0
    %1048 = vmatprep.subr.mxu0 0.0
    %1049 = vmatpush1.msra.mxu0 0.0
    %1050 = vmatprep.subr.mxu0 0.0
    %1051 = vmatpush1.msra.mxu0 0.0
    %1052 = vmatprep.subr.mxu0 0.0
    %1053 = vmatpush1.msra.mxu0 0.0
    %1054 = vmatprep.subr.mxu0 0.0
    %1055 = vmatpush1.msra.mxu0 0.0
    %1056 = vmatprep.subr.mxu0 0.0
    %1057 = vmatpush1.msra.mxu0 0.0
    %1058 = vmatprep.subr.mxu0 0.0
    %1059 = vmatpush1.msra.mxu0 0.0
    %1060 = vmatprep.subr.mxu0 0.0
    %1061 = vmatpush1.msra.mxu0 0.0
    %1062 = vmatprep.subr.mxu0 0.0
    %1063 = vmatpush1.msra.mxu0 0.0
    %1064 = vmatprep.subr.mxu0 0.0
    %1065 = vmatpush1.msra.mxu0 0.0
    %1066 = vmatprep.subr.mxu0 0.0
    %1067 = vmatpush1.msra.mxu0 0.0
    %1068 = vmatprep.subr.mxu0 0.0
    %1069 = vmatpush1.msra.mxu0 0.0
    %1070 = vmatprep.subr.mxu0 0.0
    %1071 = vmatpush1.msra.mxu0 0.0
    %1072 = vmatprep.subr.mxu0 0.0
    %1073 = vmatpush1.msra.mxu0 0.0
    %1074 = vmatprep.subr.mxu0 0.0
    %1075 = vmatpush1.msra.mxu0 0.0
    %1076 = vmatprep.subr.mxu0 0.0
    %1077 = vmatpush1.msra.mxu0 0.0
    %1078 = vmatprep.mubr.f32.mxu0 0.0
    %1079 = vmatmul.mubr.f32.gmra.mrb[0].mxu0 %v811
    %v1080 = vpop.f32.mrb[0].mxu0
    %v1081 = vadd.f32 0.0, %v1080
    %v1082 = vpop.f32.mrb[0].mxu0
    %1083 = vdwg.mxu0
    %v1085 = vsel %vm84, %v1003, 0
    %1087 = vmatprep.subr.mxu0 0.0
    %1088 = vmatpush1.msra.mxu0 %v1006
    %1089 = vmatprep.subr.mxu0 0.0
    %1090 = vmatpush1.msra.mxu0 %v1007
    %1091 = vmatprep.subr.mxu0 0.0
    %1092 = vmatpush1.msra.mxu0 %v1008
    %1093 = vmatprep.subr.mxu0 0.0
    %1094 = vmatpush1.msra.mxu0 %v1009
    %1095 = vmatprep.subr.mxu0 0.0
    %1096 = vmatpush1.msra.mxu0 0.0
    %1097 = vmatprep.subr.mxu0 0.0
    %1098 = vmatpush1.msra.mxu0 0.0
    %1099 = vmatprep.subr.mxu0 0.0
    %1100 = vmatpush1.msra.mxu0 0.0
    %1101 = vmatprep.subr.mxu0 0.0
    %1102 = vmatpush1.msra.mxu0 0.0
    %1103 = vmatprep.subr.mxu0 0.0
    %1104 = vmatpush1.msra.mxu0 0.0
    %1105 = vmatprep.subr.mxu0 0.0
    %1106 = vmatpush1.msra.mxu0 0.0
    %1107 = vmatprep.subr.mxu0 0.0
    %1108 = vmatpush1.msra.mxu0 0.0
    %1109 = vmatprep.subr.mxu0 0.0
    %1110 = vmatpush1.msra.mxu0 0.0
    %1111 = vmatprep.subr.mxu0 0.0
    %1112 = vmatpush1.msra.mxu0 0.0
    %1113 = vmatprep.subr.mxu0 0.0
    %1114 = vmatpush1.msra.mxu0 0.0
    %1115 = vmatprep.subr.mxu0 0.0
    %1116 = vmatpush1.msra.mxu0 0.0
    %1117 = vmatprep.subr.mxu0 0.0
    %1118 = vmatpush1.msra.mxu0 0.0
    %1119 = vmatprep.subr.mxu0 0.0
    %1120 = vmatpush1.msra.mxu0 0.0
    %1121 = vmatprep.subr.mxu0 0.0
    %1122 = vmatpush1.msra.mxu0 0.0
    %1123 = vmatprep.subr.mxu0 0.0
    %1124 = vmatpush1.msra.mxu0 0.0
    %1125 = vmatprep.subr.mxu0 0.0
    %1126 = vmatpush1.msra.mxu0 0.0
    %1127 = vmatprep.subr.mxu0 0.0
    %1128 = vmatpush1.msra.mxu0 0.0
    %1129 = vmatprep.subr.mxu0 0.0
    %1130 = vmatpush1.msra.mxu0 0.0
    %1131 = vmatprep.subr.mxu0 0.0
    %1132 = vmatpush1.msra.mxu0 0.0
    %1133 = vmatprep.subr.mxu0 0.0
    %1134 = vmatpush1.msra.mxu0 0.0
    %1135 = vmatprep.subr.mxu0 0.0
    %1136 = vmatpush1.msra.mxu0 0.0
    %1137 = vmatprep.subr.mxu0 0.0
    %1138 = vmatpush1.msra.mxu0 0.0
    %1139 = vmatprep.subr.mxu0 0.0
    %1140 = vmatpush1.msra.mxu0 0.0
    %1141 = vmatprep.subr.mxu0 0.0
    %1142 = vmatpush1.msra.mxu0 0.0
    %1143 = vmatprep.subr.mxu0 0.0
    %1144 = vmatpush1.msra.mxu0 0.0
    %1145 = vmatprep.subr.mxu0 0.0
    %1146 = vmatpush1.msra.mxu0 0.0
    %1147 = vmatprep.subr.mxu0 0.0
    %1148 = vmatpush1.msra.mxu0 0.0
    %1149 = vmatprep.subr.mxu0 0.0
    %1150 = vmatpush1.msra.mxu0 0.0
    %1151 = vmatprep.mubr.f32.mxu0 0.0
    %1152 = vmatmul.mubr.f32.gmra.mrb[0].mxu0 %v1085
    %v1153 = vpop.f32.mrb[0].mxu0
    %v1154 = vadd.f32 %v1081, %v1153
    %v1155 = vpop.f32.mrb[0].mxu0
    %1156 = vdwg.mxu0
    %v1157 = vld [vmem:[%s17] sm:$0x1]
    %v1159 = vlaneseq
    %v1160 = vshrl.u32 %v1159, 7
    %v1161 = vsub.s32 0, %v1160
    %v1162 = vrot.slane %v1157, %v1161
    %v1164 = vadd.f32 %v1154, %v1162
    %v1165 = vmax.f32 %v1164, 0.0
    %v1166 = vld [vmem:[%s18] sm:$0x1]
    %v1168 = vlaneseq
    %v1169 = vshrl.u32 %v1168, 7
    %v1170 = vsub.s32 0, %v1169
    %v1171 = vrot.slane %v1166, %v1170
    %v1173 = vmul.f32 %v1165, %v1171
    %v1174 = vsel %vm84, %v1173, 0.0
    %1175 = vadd.xlane.f32.xlu0 %v1174
    %v1176 = vpop.xlane.xlu0 %1175
    %v1177 = vld [vmem:[%s19] sm:$0x1]
    %v1179 = vlaneseq
    %v1180 = vshrl.u32 %v1179, 7
    %v1181 = vsub.s32 0, %v1180
    %v1182 = vrot.slane %v1177, %v1181
    %v1184 = vmul.f32 %v76, %v1182
    %1185 = vadd.xlane.f32.xlu0 %v1184
    %v1186 = vpop.xlane.xlu0 %1185
    %v1187 = vadd.f32 %v1176, %v1186
    %v1188 = vxor.u32 %v1187, 2147483648
    %v1189 = vmul.f32 %v1188, 1.442695
    %v1190 = vpow.pop %v1189
    %v1191 = vadd.f32 %v1190, 1.0
    %v1192 = vrcp.pop %v1191
    %v1193 = vmul.f32 1.0, %v1192
    %1194 = vst [vmem:[#allocation3] sm:$0xff] %v898
    %v1196 = vsel %vm84, %v810, %v1193
    %vm1197 = vcmask 269312
    %v1198 = vsel %vm1197, %v1196, 0.0
    %1199 = vst [vmem:[%s21] sm:$0xff] %v1198
    %1200 = vst.msk [vmem:[#allocation2] sm:$0xff] %vm84, %v810
    // Predicated region
    $region86: #{decoder_multi_forward_fused.1} parent=1 // pred_check
      _
    $region87: #{decoder_multi_forward_fused.1} parent=1 // pred_check_branch
      %1202 = sbr.rel (0) target = $region89
    $region88: #{decoder_multi_forward_fused.1} parent=1 // pred_region
      %s1204 = ssub.s32 128, 128
      %1205 = vsyncadd [#allocation4], %s1204
      %s1207 = sshll.u32 [#allocation3], 4
      %s1208 = int_to_ptr.vmem [resolvable:$true] %s1207
      %1210 = dma.vmem_to_hbm [thread:$0]  %s1208, 128, %s20, [#allocation4]
    $region89: #{decoder_multi_forward_fused.1} parent=1 // pred_fallthru
      _
    // Predicated region
    $region90: #{decoder_multi_forward_fused.1} parent=1 // pred_check
      _
    $region91: #{decoder_multi_forward_fused.1} parent=1 // pred_check_branch
      %1212 = sbr.rel (0) target = $region93
    $region92: #{decoder_multi_forward_fused.1} parent=1 // pred_region
      _
    $region93: #{decoder_multi_forward_fused.1} parent=1 // pred_fallthru
      _
    // Predicated region
    $region94: #{decoder_multi_forward_fused.1} parent=1 // pred_check
      _
    $region95: #{decoder_multi_forward_fused.1} parent=1 // pred_check_branch
      %1214 = sbr.rel (0) target = $region97
    $region96: #{decoder_multi_forward_fused.1} parent=1 // pred_region
      %1215 = dma.done [#allocation4], 128
    $region97: #{decoder_multi_forward_fused.1} parent=1 // pred_fallthru
      _
    // Predicated region
    $region98: #{decoder_multi_forward_fused.1} parent=1 // pred_check
      _
    $region99: #{decoder_multi_forward_fused.1} parent=1 // pred_check_branch
      %1217 = sbr.rel (0) target = $region101
    $region100: #{decoder_multi_forward_fused.1} parent=1 // pred_region
      _
    $region101: #{decoder_multi_forward_fused.1} parent=1 // pred_fallthru
      _
    %1218 = vsyncpa [#allocation4], 1

</llo_original>
